<compile_context>
chip_gen: v6e
topology: v6e:2x2x1
jax: 0.10.0
libtpu: 0.0.40
codegen_flags: <defaults>
</compile_context>

<pallas_src>
import functools

import jax
import jax.numpy as jnp
from jax import lax
from jax.experimental import pallas as pl
from jax.experimental.pallas import tpu as pltpu

SELU_ALPHA = 1.6732632423543772
SELU_SCALE = 1.0507009873554805
BN_EPS = 1e-5


def _selu(x):
    return SELU_SCALE * jnp.where(x > 0, x, SELU_ALPHA * (jnp.exp(x) - 1.0))


# ----------------------------------------------------------------------------- kernel
def residual_block_kernel(x_ref, w1_ref, b1_ref, g1_ref, be1_ref,
                          w2_ref, g2_ref, be2_ref,
                          o_ref,
                          h_ref, stats_ref,
                          *, n_valid):
    """Grid = (phase, batch-tile).

    stats_ref rows: 0=sum1 1=sumsq1 2=sum2 3=sumsq2 4=scale1 5=shift1 6=scale2 7=shift2.
    """
    phase = pl.program_id(0)
    n = pl.program_id(1)
    tn = x_ref.shape[0]
    n_pad = h_ref.shape[0]                       # padded batch size (static)
    row = pl.multiple_of(n * tn, tn)
    inv_n = 1.0 / n_valid                        # exact batch size (static)
    need_mask = n_pad != n_valid                 # static Python bool

    def masked(v):
        if not need_mask:
            return v
        rows = row + lax.broadcasted_iota(jnp.int32, (tn, 1), 0)
        return jnp.where(rows < n_valid, v, 0.0)

    def accum_stats(r0, v):
        # One combined (2,Cp) read-modify-write for sum and sum-of-squares.
        s = jnp.sum(v, axis=0, keepdims=True)
        ss = jnp.sum(v * v, axis=0, keepdims=True)
        stats_ref[r0:r0 + 2, :] = stats_ref[r0:r0 + 2, :] + jnp.concatenate([s, ss], 0)

    @pl.when(jnp.logical_and(phase == 0, n == 0))
    def _init():
        stats_ref[...] = jnp.zeros_like(stats_ref)

    @pl.when(phase == 0)
    def _phase0():
        # Linear1: W1 stored pre-transposed as [in, out] -> plain matmul, no transpose.
        w1 = w1_ref[...]
        pre = jnp.dot(x_ref[...].astype(w1.dtype), w1,
                      preferred_element_type=jnp.float32) + b1_ref[...]
        h = _selu(pre)
        h_ref[pl.ds(row, tn), :] = h.astype(h_ref.dtype)
        accum_stats(0, masked(h))                # stats from f32 h (exact even w/ bf16 stash)

    @pl.when(phase == 1)
    def _phase1():
        @pl.when(n == 0)
        def _fold_bn1():                         # fold BN1 once into scale/shift rows
            mean = stats_ref[0:1, :] * inv_n
            var = stats_ref[1:2, :] * inv_n - mean * mean
            scale = g1_ref[...] * lax.rsqrt(var + BN_EPS)
            shift = be1_ref[...] - mean * scale
            stats_ref[4:6, :] = jnp.concatenate([scale, shift], 0)

        h = h_ref[pl.ds(row, tn), :].astype(jnp.float32)
        hn = h * stats_ref[4:5, :] + stats_ref[5:6, :]
        # Linear2 (b2 omitted: a per-channel bias cancels exactly in training-mode BN).
        w2 = w2_ref[...]
        h2 = jnp.dot(hn.astype(w2.dtype), w2, preferred_element_type=jnp.float32)
        h_ref[pl.ds(row, tn), :] = h2.astype(h_ref.dtype)   # reuse the stash in place
        accum_stats(2, masked(h2))

    @pl.when(phase == 2)
    def _phase2():
        @pl.when(n == 0)
        def _fold_bn2():
            mean = stats_ref[2:3, :] * inv_n
            var = stats_ref[3:4, :] * inv_n - mean * mean
            scale = g2_ref[...] * lax.rsqrt(var + BN_EPS)
            shift = be2_ref[...] - mean * scale
            stats_ref[6:8, :] = jnp.concatenate([scale, shift], 0)

        h2 = h_ref[pl.ds(row, tn), :].astype(jnp.float32)
        y = h2 * stats_ref[6:7, :] + stats_ref[7:8, :]
        o_ref[...] = _selu(y + x_ref[...].astype(jnp.float32)).astype(o_ref.dtype)


# ----------------------------------------------------------------------------- packing
def pack_params(w1, b1, g1, be1, w2, b2, g2, be2, *, matmul_dtype=jnp.bfloat16):
    """One-time parameter packing (call at init, not per forward).

    Channels are padded to a multiple of 128 lanes; weights are pre-transposed to
    [in, out] and cast to matmul_dtype (MXU-ready, no in-kernel transpose); vectors
    become [1, Cp] f32.  b2 is dropped: it is a no-op before training-mode BatchNorm.
    """
    del b2
    C = w1.shape[0]
    Cp = max(128, ((C + 127) // 128) * 128)
    pad = Cp - C

    def pad_wt(w):
        w = jnp.asarray(w, jnp.float32).T          # [out, in] -> [in, out]
        if pad:
            w = jnp.pad(w, ((0, pad), (0, pad)))
        return w.astype(matmul_dtype)

    def pad_v(v, fill):
        v = jnp.asarray(v, jnp.float32)
        if pad:
            v = jnp.pad(v, (0, pad), constant_values=fill)
        return v.reshape(1, Cp)

    return dict(
        w1=pad_wt(w1), b1=pad_v(b1, 0.0), g1=pad_v(g1, 1.0), be1=pad_v(be1, 0.0),
        w2=pad_wt(w2), g2=pad_v(g2, 1.0), be2=pad_v(be2, 0.0),
        channels=C, padded_channels=Cp)


# ----------------------------------------------------------------------------- wrapper
def _device_vmem_bytes():
    try:
        return int(pltpu.get_tpu_info().vmem_capacity_bytes)
    except Exception:
        return 64 << 20                            # conservative: v7x per-TensorCore VMEM


def _pick_tile_n(n_rows):
    for t in (512, 256, 128):
        if n_rows >= 2 * t:                        # keep >=2 tiles so DMA pipelines
            return t
    if n_rows >= 128:
        return 128
    return max(8, ((n_rows + 7) // 8) * 8)         # tiny batch: single sublane-aligned tile


def _vmem_footprint(n_pad, cp, tn, stash_bytes, mm_bytes, x_bytes, out_bytes):
    return (n_pad * cp * stash_bytes               # activation stash (single buffer)
            + 8 * cp * 4                           # sums + folded BN scale/shift
            + 2 * tn * cp * x_bytes                # x tile, double-buffered
            + 2 * tn * cp * out_bytes              # out tile, double-buffered
            + 2 * cp * cp * mm_bytes               # W1 + W2, Buffered(1)
            + 5 * cp * 4)                          # b1,g1,be1,g2,be2, Buffered(1)


def residual_block(x, params, *, stash_dtype=None, out_dtype=jnp.float32):
    """x: [N, C] or [N, Cp], f32 or bf16 (bf16 recommended); params from pack_params.

    Keep activations channel-padded to Cp (and bf16) end-to-end across the network so
    no extra pad / slice / cast HBM passes are needed around each block.
    """
    C, Cp = params["channels"], params["padded_channels"]
    N = x.shape[0]
    chan_padded_in = x.shape[1] == Cp
    if not chan_padded_in:
        assert x.shape[1] == C, "x channel dim must be C or padded Cp"
        if Cp != C:
            x = jnp.pad(x, ((0, 0), (0, Cp - C)))

    tn = _pick_tile_n(N)
    n_pad = ((N + tn - 1) // tn) * tn
    if n_pad != N:
        x = jnp.pad(x, ((0, n_pad - N), (0, 0)))   # padded rows are masked out of BN stats
    nt = n_pad // tn

    mm_bytes = jnp.dtype(params["w1"].dtype).itemsize
    x_bytes = jnp.dtype(x.dtype).itemsize
    out_bytes = jnp.dtype(out_dtype).itemsize

    # Exact VMEM accounting, clamped to 85% of the device's physical VMEM.
    budget = int(0.85 * _device_vmem_bytes())
    headroom = 8 << 20                             # compiler-internal scratch slack
    if stash_dtype is None:                        # f32 stash when it fits, else bf16
        need_f32 = _vmem_footprint(n_pad, Cp, tn, 4, mm_bytes, x_bytes, out_bytes)
        stash_dtype = jnp.float32 if need_f32 + headroom <= budget else jnp.bfloat16
    stash_bytes = jnp.dtype(stash_dtype).itemsize
    need = _vmem_footprint(n_pad, Cp, tn, stash_bytes, mm_bytes, x_bytes, out_bytes)
    if need + headroom > budget:
        # TODO(synk): for very large N*Cp move the stash to HBM (memory_space=pl.ANY)
        # and double-buffer it manually with pltpu.make_async_copy.
        raise ValueError(f"activation stash does not fit in VMEM "
                         f"(need ~{need >> 20} MiB, budget {budget >> 20} MiB)")
    vmem_limit = int(min(budget, max(need + headroom, 24 << 20)))

    stream = lambda p, n: (jnp.where(p == 1, 0, n), 0)        # x used in phases 0 and 2
    resident = lambda shape: pl.BlockSpec(shape, lambda p, n: (0, 0),
                                          pipeline_mode=pl.Buffered(1))

    grid_spec = pltpu.PrefetchScalarGridSpec(
        num_scalar_prefetch=0,
        grid=(3, nt),                              # (phase, batch tile), both carried
        in_specs=[
            pl.BlockSpec((tn, Cp), stream),        # x: streamed; parked on tile 0 in phase 1
            resident((Cp, Cp)),                    # W1 [in, out]
            resident((1, Cp)),                     # b1
            resident((1, Cp)),                     # gamma1
            resident((1, Cp)),                     # beta1
            resident((Cp, Cp)),                    # W2 [in, out]
            resident((1, Cp)),                     # gamma2
            resident((1, Cp)),                     # beta2
        ],
        # out: only phase 2 produces data; park on tile 0 otherwise so each block is
        # written back to HBM exactly once and never with stale contents.
        out_specs=pl.BlockSpec((tn, Cp), lambda p, n: (jnp.where(p == 2, n, 0), 0)),
        scratch_shapes=[
            pltpu.VMEM((n_pad, Cp), stash_dtype),  # h / h2 stash (reused in place)
            pltpu.VMEM((8, Cp), jnp.float32),      # sums + folded BN scale/shift
        ],
    )
    # TODO(synk): on v7x the second TensorCore idles; exact full-batch BN across 2 cores
    # needs a core_map batch split plus a CMEM sum/sumsq exchange with pltpu.core_barrier.
    out = pl.pallas_call(
        functools.partial(residual_block_kernel, n_valid=N),
        out_shape=jax.ShapeDtypeStruct((n_pad, Cp), out_dtype),
        grid_spec=grid_spec,
        compiler_params=pltpu.CompilerParams(
            dimension_semantics=("arbitrary", "arbitrary"),
            vmem_limit_bytes=vmem_limit),
    )(x, params["w1"], params["b1"], params["g1"], params["be1"],
      params["w2"], params["g2"], params["be2"])

    if n_pad != N:
        out = out[:N]
    if not chan_padded_in and Cp != C:
        out = out[:, :C]
    return out


# ----------------------------------------------------------------------------- reference
def _bn_ref(h, gamma, beta):
    mean = jnp.mean(h, axis=0, keepdims=True)
    var = jnp.mean((h - mean) ** 2, axis=0, keepdims=True)
    return (h - mean) * lax.rsqrt(var + BN_EPS) * gamma + beta


def residual_block_ref(x, w1, b1, g1, be1, w2, b2, g2, be2,
                       *, matmul_dtype=None, x_dtype=None):
    """Pure-JAX training-mode reference.  matmul_dtype / x_dtype mimic the kernel's
    bf16 MXU operands and bf16 activation streaming (f32 accumulation / math)."""
    xs = x if x_dtype is None else x.astype(x_dtype).astype(jnp.float32)

    def mm(a, w):
        if matmul_dtype is not None:
            a = a.astype(matmul_dtype).astype(jnp.float32)
            w = w.astype(matmul_dtype).astype(jnp.float32)
        return a @ w.T

    h = _selu(mm(xs, w1) + b1)
    h = _bn_ref(h, g1, be1)
    h2 = mm(h, w2) + b2                            # b2 kept here to show it cancels
    h2 = _bn_ref(h2, g2, be2)
    return _selu(h2 + xs)


if __name__ == "__main__":
    C = 128                                        # lane-dense channel width
    key = jax.random.PRNGKey(0)
    kx, kw1, kb1, kw2, kb2, kg1, kbe1, kg2, kbe2 = jax.random.split(key, 9)

    w1 = jax.random.normal(kw1, (C, C), dtype=jnp.float32) * 0.1
    b1 = jax.random.normal(kb1, (C,), dtype=jnp.float32) * 0.1
    w2 = jax.random.normal(kw2, (C, C), dtype=jnp.float32) * 0.1
    b2 = jax.random.normal(kb2, (C,), dtype=jnp.float32) * 0.1
    g1 = 1.0 + 0.1 * jax.random.normal(kg1, (C,), dtype=jnp.float32)
    be1 = 0.1 * jax.random.normal(kbe1, (C,), dtype=jnp.float32)
    g2 = 1.0 + 0.1 * jax.random.normal(kg2, (C,), dtype=jnp.float32)
    be2 = 0.1 * jax.random.normal(kbe2, (C,), dtype=jnp.float32)
    params = pack_params(w1, b1, g1, be1, w2, b2, g2, be2, matmul_dtype=jnp.bfloat16)

    def check(n_rows, stash_dtype, tol):
        xf = jax.random.normal(jax.random.fold_in(kx, n_rows), (n_rows, C), jnp.float32)
        xb = xf.astype(jnp.bfloat16)               # network streams activations in bf16
        out = jax.block_until_ready(residual_block(xb, params, stash_dtype=stash_dtype))
        ref = residual_block_ref(xf, w1, b1, g1, be1, w2, b2, g2, be2,
                                 matmul_dtype=jnp.bfloat16, x_dtype=jnp.bfloat16)
        out = out.astype(jnp.float32)
        err = float(jnp.max(jnp.abs(out - ref)))
        assert jnp.allclose(out, ref, atol=tol, rtol=tol), \
            f"N={n_rows} stash={stash_dtype}: mismatch vs reference, max|err|={err}"

    check(256, None, 2e-3)            # auto (f32 stash at this size), 2 batch tiles
    check(200, None, 2e-3)            # N with no clean divisor: padded rows masked from stats
    check(256, jnp.bfloat16, 2e-2)    # forced bf16 stash (large-N / v7x VMEM path)

    print("KERNEL_OK")
</pallas_src>

<mosaic_0001>
module attributes {stable_mosaic.version = 11 : i64} {
  func.func @residual_block_kernel(%arg0: i32, %arg1: i32, %arg2: memref<128x128xbf16, #tpu.memory_space<vmem>>, %arg3: memref<128x128xbf16, #tpu.memory_space<vmem>>, %arg4: memref<1x128xf32, #tpu.memory_space<vmem>>, %arg5: memref<1x128xf32, #tpu.memory_space<vmem>>, %arg6: memref<1x128xf32, #tpu.memory_space<vmem>>, %arg7: memref<128x128xbf16, #tpu.memory_space<vmem>>, %arg8: memref<1x128xf32, #tpu.memory_space<vmem>>, %arg9: memref<1x128xf32, #tpu.memory_space<vmem>>, %arg10: memref<128x128xf32, #tpu.memory_space<vmem>>, %arg11: memref<256x128xf32, #tpu.memory_space<vmem>>, %arg12: memref<8x128xf32, #tpu.memory_space<vmem>>) attributes {dimension_semantics = [#tpu.dimension_semantics<arbitrary>, #tpu.dimension_semantics<arbitrary>], iteration_bounds = array<i64: 3, 2>, scalar_prefetch = 0 : i64, scratch_operands = 2 : i64, tpu.core_type = #tpu.core_type<tc>, window_params = [{transform_indices = @transform_0, window_bounds = array<i64: 128, 128>}, {pipeline_mode = #tpu.pipeline_mode<synchronous>, transform_indices = @transform_1, window_bounds = array<i64: 128, 128>}, {pipeline_mode = #tpu.pipeline_mode<synchronous>, transform_indices = @transform_2, window_bounds = array<i64: 1, 128>}, {pipeline_mode = #tpu.pipeline_mode<synchronous>, transform_indices = @transform_3, window_bounds = array<i64: 1, 128>}, {pipeline_mode = #tpu.pipeline_mode<synchronous>, transform_indices = @transform_4, window_bounds = array<i64: 1, 128>}, {pipeline_mode = #tpu.pipeline_mode<synchronous>, transform_indices = @transform_5, window_bounds = array<i64: 128, 128>}, {pipeline_mode = #tpu.pipeline_mode<synchronous>, transform_indices = @transform_6, window_bounds = array<i64: 1, 128>}, {pipeline_mode = #tpu.pipeline_mode<synchronous>, transform_indices = @transform_7, window_bounds = array<i64: 1, 128>}, {transform_indices = @transform_8, window_bounds = array<i64: 128, 128>}]} {
    %c128_i32 = arith.constant 128 : i32
    %0 = arith.muli %arg1, %c128_i32 : i32
    %1 = tpu.assume_multiple %0, 128 : i32
    %c0_i32 = arith.constant 0 : i32
    %2 = arith.cmpi eq, %arg0, %c0_i32 : i32
    %c0_i32_0 = arith.constant 0 : i32
    %3 = arith.cmpi eq, %arg1, %c0_i32_0 : i32
    %4 = arith.andi %2, %3 : i1
    %5 = arith.extui %4 : i1 to i32
    %c0_i32_1 = arith.constant 0 : i32
    %6 = arith.cmpi ne, %5, %c0_i32_1 : i32
    scf.if %6 {
      %cst = arith.constant 0.000000e+00 : f32
      %16 = vector.broadcast %cst : f32 to vector<8x128xf32>
      %c0 = arith.constant 0 : index
      %c0_6 = arith.constant 0 : index
      %17 = vector.load %arg12[%c0, %c0_6] : memref<8x128xf32, #tpu.memory_space<vmem>>, vector<8x128xf32>
      tpu.vector_store %arg12[%c0, %c0_6], %16 {strides = array<i32>} : memref<8x128xf32, #tpu.memory_space<vmem>>, vector<8x128xf32>,
    } else {
    }
    %c0_i32_2 = arith.constant 0 : i32
    %7 = arith.cmpi eq, %arg0, %c0_i32_2 : i32
    %8 = arith.extui %7 : i1 to i32
    %c0_i32_3 = arith.constant 0 : i32
    %9 = arith.cmpi ne, %8, %c0_i32_3 : i32
    scf.if %9 {
      %c0 = arith.constant 0 : index
      %c0_6 = arith.constant 0 : index
      %16 = vector.load %arg3[%c0, %c0_6] : memref<128x128xbf16, #tpu.memory_space<vmem>>, vector<128x128xbf16>
      %c0_7 = arith.constant 0 : index
      %c0_8 = arith.constant 0 : index
      %17 = vector.load %arg2[%c0_7, %c0_8] : memref<128x128xbf16, #tpu.memory_space<vmem>>, vector<128x128xbf16>
      %cst = arith.constant dense<0.000000e+00> : vector<128x128xf32>
      %18 = tpu.matmul %17, %16, %cst {dimension_numbers = #tpu.dot_dimension_numbers<[1], [0], [0], [1], [0, 0, 1, 1], [], []>} : vector<128x128xbf16>, vector<128x128xbf16>, vector<128x128xf32> -> vector<128x128xf32>
      %c0_9 = arith.constant 0 : index
      %c0_10 = arith.constant 0 : index
      %19 = vector.load %arg4[%c0_9, %c0_10] : memref<1x128xf32, #tpu.memory_space<vmem>>, vector<1x128xf32>
      %20 = vector.broadcast %19 : vector<1x128xf32> to vector<128x128xf32>
      %21 = arith.addf %18, %20 : vector<128x128xf32>
      %cst_11 = arith.constant 0.000000e+00 : f32
      %22 = vector.broadcast %cst_11 : f32 to vector<128x128xf32>
      %23 = arith.cmpf ogt, %21, %22 : vector<128x128xf32>
      %24 = math.exp %21 : vector<128x128xf32>
      %cst_12 = arith.constant 1.000000e+00 : f32
      %25 = vector.broadcast %cst_12 : f32 to vector<128x128xf32>
      %26 = arith.subf %24, %25 : vector<128x128xf32>
      %cst_13 = arith.constant 1.67326319 : f32
      %27 = vector.broadcast %cst_13 : f32 to vector<128x128xf32>
      %28 = arith.mulf %27, %26 : vector<128x128xf32>
      %29 = arith.select %23, %21, %28 : vector<128x128xi1>, vector<128x128xf32>
      %cst_14 = arith.constant 1.05070102 : f32
      %30 = vector.broadcast %cst_14 : f32 to vector<128x128xf32>
      %31 = arith.mulf %30, %29 : vector<128x128xf32>
      %32 = arith.index_cast %1 : i32 to index
      %c0_15 = arith.constant 0 : index
      %33 = vector.load %arg11[%32, %c0_15] : memref<256x128xf32, #tpu.memory_space<vmem>>, vector<128x128xf32>
      tpu.vector_store %arg11[%32, %c0_15], %31 {strides = array<i32>} : memref<256x128xf32, #tpu.memory_space<vmem>>, vector<128x128xf32>,
      %cst_16 = arith.constant dense<0.000000e+00> : vector<128xf32>
      %34 = vector.multi_reduction <add>, %31, %cst_16 [0] : vector<128x128xf32> to vector<128xf32>
      %35 = vector.shape_cast %34 : vector<128xf32> to vector<1x128xf32>
      %36 = arith.mulf %31, %31 : vector<128x128xf32>
      %cst_17 = arith.constant dense<0.000000e+00> : vector<128xf32>
      %37 = vector.multi_reduction <add>, %36, %cst_17 [0] : vector<128x128xf32> to vector<128xf32>
      %38 = vector.shape_cast %37 : vector<128xf32> to vector<1x128xf32>
      %c0_18 = arith.constant 0 : index
      %c0_19 = arith.constant 0 : index
      %39 = vector.load %arg12[%c0_18, %c0_19] : memref<8x128xf32, #tpu.memory_space<vmem>>, vector<2x128xf32>
      %40 = tpu.concatenate %35, %38 in 0 : vector<1x128xf32>, vector<1x128xf32> -> vector<2x128xf32>
      %41 = arith.addf %39, %40 : vector<2x128xf32>
      %c0_20 = arith.constant 0 : index
      %c0_21 = arith.constant 0 : index
      %42 = vector.load %arg12[%c0_20, %c0_21] : memref<8x128xf32, #tpu.memory_space<vmem>>, vector<2x128xf32>
      tpu.vector_store %arg12[%c0_20, %c0_21], %41 {strides = array<i32>} : memref<8x128xf32, #tpu.memory_space<vmem>>, vector<2x128xf32>,
    } else {
    }
    %c1_i32 = arith.constant 1 : i32
    %10 = arith.cmpi eq, %arg0, %c1_i32 : i32
    %11 = arith.extui %10 : i1 to i32
    %c0_i32_4 = arith.constant 0 : i32
    %12 = arith.cmpi ne, %11, %c0_i32_4 : i32
    scf.if %12 {
      %c0_i32_6 = arith.constant 0 : i32
      %16 = arith.cmpi eq, %arg1, %c0_i32_6 : i32
      %17 = arith.extui %16 : i1 to i32
      %c0_i32_7 = arith.constant 0 : i32
      %18 = arith.cmpi ne, %17, %c0_i32_7 : i32
      scf.if %18 {
        %c0_18 = arith.constant 0 : index
        %c0_19 = arith.constant 0 : index
        %41 = vector.load %arg12[%c0_18, %c0_19] : memref<8x128xf32, #tpu.memory_space<vmem>>, vector<1x128xf32>
        %cst_20 = arith.constant 3.906250e-03 : f32
        %42 = vector.broadcast %cst_20 : f32 to vector<1x128xf32>
        %43 = arith.mulf %41, %42 : vector<1x128xf32>
        %c1 = arith.constant 1 : index
        %c0_21 = arith.constant 0 : index
        %44 = vector.load %arg12[%c1, %c0_21] : memref<8x128xf32, #tpu.memory_space<vmem>>, vector<1x128xf32>
        %cst_22 = arith.constant 3.906250e-03 : f32
        %45 = vector.broadcast %cst_22 : f32 to vector<1x128xf32>
        %46 = arith.mulf %44, %45 : vector<1x128xf32>
        %47 = arith.mulf %43, %43 : vector<1x128xf32>
        %48 = arith.subf %46, %47 : vector<1x128xf32>
        %c0_23 = arith.constant 0 : index
        %c0_24 = arith.constant 0 : index
        %49 = vector.load %arg5[%c0_23, %c0_24] : memref<1x128xf32, #tpu.memory_space<vmem>>, vector<1x128xf32>
        %cst_25 = arith.constant 9.99999974E-6 : f32
        %50 = vector.broadcast %cst_25 : f32 to vector<1x128xf32>
        %51 = arith.addf %48, %50 : vector<1x128xf32>
        %52 = math.rsqrt %51 : vector<1x128xf32>
        %53 = arith.mulf %49, %52 : vector<1x128xf32>
        %c0_26 = arith.constant 0 : index
        %c0_27 = arith.constant 0 : index
        %54 = vector.load %arg6[%c0_26, %c0_27] : memref<1x128xf32, #tpu.memory_space<vmem>>, vector<1x128xf32>
        %55 = arith.mulf %43, %53 : vector<1x128xf32>
        %56 = arith.subf %54, %55 : vector<1x128xf32>
        %57 = tpu.concatenate %53, %56 in 0 : vector<1x128xf32>, vector<1x128xf32> -> vector<2x128xf32>
        %c4_28 = arith.constant 4 : index
        %c0_29 = arith.constant 0 : index
        %58 = vector.load %arg12[%c4_28, %c0_29] : memref<8x128xf32, #tpu.memory_space<vmem>>, vector<2x128xf32>
        tpu.vector_store %arg12[%c4_28, %c0_29], %57 {strides = array<i32>} : memref<8x128xf32, #tpu.memory_space<vmem>>, vector<2x128xf32>,
      } else {
      }
      %19 = arith.index_cast %1 : i32 to index
      %c0 = arith.constant 0 : index
      %20 = vector.load %arg11[%19, %c0] : memref<256x128xf32, #tpu.memory_space<vmem>>, vector<128x128xf32>
      %c4 = arith.constant 4 : index
      %c0_8 = arith.constant 0 : index
      %21 = vector.load %arg12[%c4, %c0_8] : memref<8x128xf32, #tpu.memory_space<vmem>>, vector<1x128xf32>
      %22 = vector.broadcast %21 : vector<1x128xf32> to vector<128x128xf32>
      %23 = arith.mulf %20, %22 : vector<128x128xf32>
      %c5 = arith.constant 5 : index
      %c0_9 = arith.constant 0 : index
      %24 = vector.load %arg12[%c5, %c0_9] : memref<8x128xf32, #tpu.memory_space<vmem>>, vector<1x128xf32>
      %25 = vector.broadcast %24 : vector<1x128xf32> to vector<128x128xf32>
      %26 = arith.addf %23, %25 : vector<128x128xf32>
      %c0_10 = arith.constant 0 : index
      %c0_11 = arith.constant 0 : index
      %27 = vector.load %arg7[%c0_10, %c0_11] : memref<128x128xbf16, #tpu.memory_space<vmem>>, vector<128x128xbf16>
      %28 = arith.truncf %26 : vector<128x128xf32> to vector<128x128xbf16>
      %cst = arith.constant dense<0.000000e+00> : vector<128x128xf32>
      %29 = tpu.matmul %28, %27, %cst {dimension_numbers = #tpu.dot_dimension_numbers<[1], [0], [0], [1], [0, 0, 1, 1], [], []>} : vector<128x128xbf16>, vector<128x128xbf16>, vector<128x128xf32> -> vector<128x128xf32>
      %30 = arith.index_cast %1 : i32 to index
      %c0_12 = arith.constant 0 : index
      %31 = vector.load %arg11[%30, %c0_12] : memref<256x128xf32, #tpu.memory_space<vmem>>, vector<128x128xf32>
      tpu.vector_store %arg11[%30, %c0_12], %29 {strides = array<i32>} : memref<256x128xf32, #tpu.memory_space<vmem>>, vector<128x128xf32>,
      %cst_13 = arith.constant dense<0.000000e+00> : vector<128xf32>
      %32 = vector.multi_reduction <add>, %29, %cst_13 [0] : vector<128x128xf32> to vector<128xf32>
      %33 = vector.shape_cast %32 : vector<128xf32> to vector<1x128xf32>
      %34 = arith.mulf %29, %29 : vector<128x128xf32>
      %cst_14 = arith.constant dense<0.000000e+00> : vector<128xf32>
      %35 = vector.multi_reduction <add>, %34, %cst_14 [0] : vector<128x128xf32> to vector<128xf32>
      %36 = vector.shape_cast %35 : vector<128xf32> to vector<1x128xf32>
      %c2 = arith.constant 2 : index
      %c0_15 = arith.constant 0 : index
      %37 = vector.load %arg12[%c2, %c0_15] : memref<8x128xf32, #tpu.memory_space<vmem>>, vector<2x128xf32>
      %38 = tpu.concatenate %33, %36 in 0 : vector<1x128xf32>, vector<1x128xf32> -> vector<2x128xf32>
      %39 = arith.addf %37, %38 : vector<2x128xf32>
      %c2_16 = arith.constant 2 : index
      %c0_17 = arith.constant 0 : index
      %40 = vector.load %arg12[%c2_16, %c0_17] : memref<8x128xf32, #tpu.memory_space<vmem>>, vector<2x128xf32>
      tpu.vector_store %arg12[%c2_16, %c0_17], %39 {strides = array<i32>} : memref<8x128xf32, #tpu.memory_space<vmem>>, vector<2x128xf32>,
    } else {
    }
    %c2_i32 = arith.constant 2 : i32
    %13 = arith.cmpi eq, %arg0, %c2_i32 : i32
    %14 = arith.extui %13 : i1 to i32
    %c0_i32_5 = arith.constant 0 : i32
    %15 = arith.cmpi ne, %14, %c0_i32_5 : i32
    scf.if %15 {
      %c0_i32_6 = arith.constant 0 : i32
      %16 = arith.cmpi eq, %arg1, %c0_i32_6 : i32
      %17 = arith.extui %16 : i1 to i32
      %c0_i32_7 = arith.constant 0 : i32
      %18 = arith.cmpi ne, %17, %c0_i32_7 : i32
      scf.if %18 {
        %c2 = arith.constant 2 : index
        %c0_17 = arith.constant 0 : index
        %41 = vector.load %arg12[%c2, %c0_17] : memref<8x128xf32, #tpu.memory_space<vmem>>, vector<1x128xf32>
        %cst_18 = arith.constant 3.906250e-03 : f32
        %42 = vector.broadcast %cst_18 : f32 to vector<1x128xf32>
        %43 = arith.mulf %41, %42 : vector<1x128xf32>
        %c3 = arith.constant 3 : index
        %c0_19 = arith.constant 0 : index
        %44 = vector.load %arg12[%c3, %c0_19] : memref<8x128xf32, #tpu.memory_space<vmem>>, vector<1x128xf32>
        %cst_20 = arith.constant 3.906250e-03 : f32
        %45 = vector.broadcast %cst_20 : f32 to vector<1x128xf32>
        %46 = arith.mulf %44, %45 : vector<1x128xf32>
        %47 = arith.mulf %43, %43 : vector<1x128xf32>
        %48 = arith.subf %46, %47 : vector<1x128xf32>
        %c0_21 = arith.constant 0 : index
        %c0_22 = arith.constant 0 : index
        %49 = vector.load %arg8[%c0_21, %c0_22] : memref<1x128xf32, #tpu.memory_space<vmem>>, vector<1x128xf32>
        %cst_23 = arith.constant 9.99999974E-6 : f32
        %50 = vector.broadcast %cst_23 : f32 to vector<1x128xf32>
        %51 = arith.addf %48, %50 : vector<1x128xf32>
        %52 = math.rsqrt %51 : vector<1x128xf32>
        %53 = arith.mulf %49, %52 : vector<1x128xf32>
        %c0_24 = arith.constant 0 : index
        %c0_25 = arith.constant 0 : index
        %54 = vector.load %arg9[%c0_24, %c0_25] : memref<1x128xf32, #tpu.memory_space<vmem>>, vector<1x128xf32>
        %55 = arith.mulf %43, %53 : vector<1x128xf32>
        %56 = arith.subf %54, %55 : vector<1x128xf32>
        %57 = tpu.concatenate %53, %56 in 0 : vector<1x128xf32>, vector<1x128xf32> -> vector<2x128xf32>
        %c6_26 = arith.constant 6 : index
        %c0_27 = arith.constant 0 : index
        %58 = vector.load %arg12[%c6_26, %c0_27] : memref<8x128xf32, #tpu.memory_space<vmem>>, vector<2x128xf32>
        tpu.vector_store %arg12[%c6_26, %c0_27], %57 {strides = array<i32>} : memref<8x128xf32, #tpu.memory_space<vmem>>, vector<2x128xf32>,
      } else {
      }
      %19 = arith.index_cast %1 : i32 to index
      %c0 = arith.constant 0 : index
      %20 = vector.load %arg11[%19, %c0] : memref<256x128xf32, #tpu.memory_space<vmem>>, vector<128x128xf32>
      %c6 = arith.constant 6 : index
      %c0_8 = arith.constant 0 : index
      %21 = vector.load %arg12[%c6, %c0_8] : memref<8x128xf32, #tpu.memory_space<vmem>>, vector<1x128xf32>
      %22 = vector.broadcast %21 : vector<1x128xf32> to vector<128x128xf32>
      %23 = arith.mulf %20, %22 : vector<128x128xf32>
      %c7 = arith.constant 7 : index
      %c0_9 = arith.constant 0 : index
      %24 = vector.load %arg12[%c7, %c0_9] : memref<8x128xf32, #tpu.memory_space<vmem>>, vector<1x128xf32>
      %25 = vector.broadcast %24 : vector<1x128xf32> to vector<128x128xf32>
      %26 = arith.addf %23, %25 : vector<128x128xf32>
      %c0_10 = arith.constant 0 : index
      %c0_11 = arith.constant 0 : index
      %27 = vector.load %arg2[%c0_10, %c0_11] : memref<128x128xbf16, #tpu.memory_space<vmem>>, vector<128x128xbf16>
      %28 = arith.extf %27 : vector<128x128xbf16> to vector<128x128xf32>
      %29 = arith.addf %26, %28 : vector<128x128xf32>
      %cst = arith.constant 0.000000e+00 : f32
      %30 = vector.broadcast %cst : f32 to vector<128x128xf32>
      %31 = arith.cmpf ogt, %29, %30 : vector<128x128xf32>
      %32 = math.exp %29 : vector<128x128xf32>
      %cst_12 = arith.constant 1.000000e+00 : f32
      %33 = vector.broadcast %cst_12 : f32 to vector<128x128xf32>
      %34 = arith.subf %32, %33 : vector<128x128xf32>
      %cst_13 = arith.constant 1.67326319 : f32
      %35 = vector.broadcast %cst_13 : f32 to vector<128x128xf32>
      %36 = arith.mulf %35, %34 : vector<128x128xf32>
      %37 = arith.select %31, %29, %36 : vector<128x128xi1>, vector<128x128xf32>
      %cst_14 = arith.constant 1.05070102 : f32
      %38 = vector.broadcast %cst_14 : f32 to vector<128x128xf32>
      %39 = arith.mulf %38, %37 : vector<128x128xf32>
      %c0_15 = arith.constant 0 : index
      %c0_16 = arith.constant 0 : index
      %40 = vector.load %arg10[%c0_15, %c0_16] : memref<128x128xf32, #tpu.memory_space<vmem>>, vector<128x128xf32>
      tpu.vector_store %arg10[%c0_15, %c0_16], %39 {strides = array<i32>} : memref<128x128xf32, #tpu.memory_space<vmem>>, vector<128x128xf32>,
    } else {
    }
    return
  }
  func.func @transform_0(%arg0: i32, %arg1: i32) -> (i32, i32) {
    %c1_i32 = arith.constant 1 : i32
    %0 = arith.cmpi eq, %arg0, %c1_i32 : i32
    %c0_i32 = arith.constant 0 : i32
    %1 = arith.select %0, %c0_i32, %arg1 : i32
    %c0_i32_0 = arith.constant 0 : i32
    %c0_i32_1 = arith.constant 0 : i32
    return %1, %c0_i32_0 : i32, i32
  }
  func.func @transform_1(%arg0: i32, %arg1: i32) -> (i32, i32) {
    %c0_i32 = arith.constant 0 : i32
    %c0_i32_0 = arith.constant 0 : i32
    %c0_i32_1 = arith.constant 0 : i32
    return %c0_i32, %c0_i32_0 : i32, i32
  }
  func.func @transform_2(%arg0: i32, %arg1: i32) -> (i32, i32) {
    %c0_i32 = arith.constant 0 : i32
    %c0_i32_0 = arith.constant 0 : i32
    %c0_i32_1 = arith.constant 0 : i32
    return %c0_i32, %c0_i32_0 : i32, i32
  }
  func.func @transform_3(%arg0: i32, %arg1: i32) -> (i32, i32) {
    %c0_i32 = arith.constant 0 : i32
    %c0_i32_0 = arith.constant 0 : i32
    %c0_i32_1 = arith.constant 0 : i32
    return %c0_i32, %c0_i32_0 : i32, i32
  }
  func.func @transform_4(%arg0: i32, %arg1: i32) -> (i32, i32) {
    %c0_i32 = arith.constant 0 : i32
    %c0_i32_0 = arith.constant 0 : i32
    %c0_i32_1 = arith.constant 0 : i32
    return %c0_i32, %c0_i32_0 : i32, i32
  }
  func.func @transform_5(%arg0: i32, %arg1: i32) -> (i32, i32) {
    %c0_i32 = arith.constant 0 : i32
    %c0_i32_0 = arith.constant 0 : i32
    %c0_i32_1 = arith.constant 0 : i32
    return %c0_i32, %c0_i32_0 : i32, i32
  }
  func.func @transform_6(%arg0: i32, %arg1: i32) -> (i32, i32) {
    %c0_i32 = arith.constant 0 : i32
    %c0_i32_0 = arith.constant 0 : i32
    %c0_i32_1 = arith.constant 0 : i32
    return %c0_i32, %c0_i32_0 : i32, i32
  }
  func.func @transform_7(%arg0: i32, %arg1: i32) -> (i32, i32) {
    %c0_i32 = arith.constant 0 : i32
    %c0_i32_0 = arith.constant 0 : i32
    %c0_i32_1 = arith.constant 0 : i32
    return %c0_i32, %c0_i32_0 : i32, i32
  }
  func.func @transform_8(%arg0: i32, %arg1: i32) -> (i32, i32) {
    %c2_i32 = arith.constant 2 : i32
    %0 = arith.cmpi eq, %arg0, %c2_i32 : i32
    %c0_i32 = arith.constant 0 : i32
    %1 = arith.select %0, %arg1, %c0_i32 : i32
    %c0_i32_0 = arith.constant 0 : i32
    %c0_i32_1 = arith.constant 0 : i32
    return %1, %c0_i32_0 : i32, i32
  }
}

</mosaic_0001>

<llo_original>
// kernel: tpu_custom_call.1
$region0: #{tpu_custom_call.1}
  #allocation0 [shape = 'u32[]', space=smem, size = 0x4, offset = 0x4, fixed_abs, tag = 'smem constant byte address 0x4 - core index']
  #allocation1 [shape = 'u32[144,128]{1,0:T(1,128)}', space=vmem, size = 0x12000, scoped, tag = 'internal scratch']
  #allocation2 [shape = 'f32[256,128]{1,0:T(8,128)}', space=vmem, size = 0x20000, scoped, tag = 'scratch operand']
  #allocation3 [shape = 'f32[8,128]{1,0:T(8,128)}', space=vmem, size = 0x1000, scoped, tag = 'scratch operand']
  %s0 = inlined_call_operand.hbm [shape: bf16[256,128], index: 0, kind: input, shape index: {}]
  %s1 = inlined_call_operand.hbm [shape: bf16[128,128], index: 1, kind: input, shape index: {}]
  %s2 = inlined_call_operand.vmem [shape: f32[1,128], index: 2, kind: input, shape index: {}]
  %s3 = inlined_call_operand.vmem [shape: f32[1,128], index: 3, kind: input, shape index: {}]
  %s4 = inlined_call_operand.vmem [shape: f32[1,128], index: 4, kind: input, shape index: {}]
  %s5 = inlined_call_operand.hbm [shape: bf16[128,128], index: 5, kind: input, shape index: {}]
  %s6 = inlined_call_operand.vmem [shape: f32[1,128], index: 6, kind: input, shape index: {}]
  %s7 = inlined_call_operand.vmem [shape: f32[1,128], index: 7, kind: input, shape index: {}]
  %s8 = inlined_call_operand.hbm [shape: f32[256,128], index: 8, kind: output, shape index: {}]
  %s9 = sld [smem:[#allocation0]]
  $region101: #{tpu_custom_call.1} parent=0
    _
  %s11 = ssub.s32 1, %s9
  %s12 = scalar_select 0, %s11, %s9
  $region1: #{tpu_custom_call.1} parent=0
    #allocation4 [shape = 'u8[65536]{0}', space=vmem, size = 0x10000, scoped, tag = 'input window, operand 0']
    #allocation5 [shape = 's32[2]{0}', space=sflag, size = 0x8, scoped, tag = 'scoped memory for tpu_custom_call.1']
    #allocation6 [shape = 's32[2]{0}', space=sflag, size = 0x8, scoped, tag = 'scoped memory for tpu_custom_call.1']
    #allocation7 [shape = 'u8[32768]{0}', space=vmem, size = 0x8000, scoped, tag = 'input window, operand 1, single buffered']
    #allocation8 [shape = 's32[1]{0}', space=sflag, size = 0x4, scoped, tag = 'scoped memory for tpu_custom_call.1']
    #allocation9 [shape = 'u8[32768]{0}', space=vmem, size = 0x8000, scoped, tag = 'input window, operand 5, single buffered']
    #allocation10 [shape = 'u8[131072]{0}', space=vmem, size = 0x20000, scoped, tag = 'output window, operand 0']
    %13 = vsyncpa [#allocation5], 0
    %s14 = scalar_lea.sflag [#allocation5], 1
    %15 = vsyncpa %s14, 0
    %16 = vsyncpa [#allocation8], 0
    %17 = vsyncpa [#allocation6], 0
    %s18 = scalar_lea.sflag [#allocation6], 1
    %19 = vsyncpa %s18, 0
    loop: start=0, step=1, limit=8
    $region2: #{tpu_custom_call.1} parent=1 // loop_pre_header
      _
    $region3: #{tpu_custom_call.1} parent=1 // loop_header
      %s21 = sphi 0, %s25
      %p22 = scmp.ge.s32.totalorder %s21, 8
      %s28 = sphi 0, %s40
      %s29 = sphi 0, %s36
      %s30 = sphi 0, %s28
      %s31 = sphi 0, %s29
      %s32 = sphi 0, %s30
      %s33 = sphi 0, %s31
      %s47 = sphi 0, %s49
      %s50 = sphi 0, %s47
      %s51 = sphi 0, %s50
      %s67 = sphi 0, %s51
      %s71 = sphi 0, %s71
      %s73 = sphi 0, %s71
      %s74 = sphi 0, %s73
      %s88 = sphi 0, %s74
      %s92 = sphi 0, %s92
      %s94 = sphi 0, %s92
      %s95 = sphi 0, %s94
      %s109 = sphi 0, %s95
      %s113 = sphi 0, %s113
      %s115 = sphi 0, %s113
      %s116 = sphi 0, %s115
      %s130 = sphi 0, %s116
      %s134 = sphi 0, %s134
      %s136 = sphi 0, %s134
      %s137 = sphi 0, %s136
      %s151 = sphi 0, %s137
      %s155 = sphi 0, %s155
      %s157 = sphi 0, %s155
      %s158 = sphi 0, %s157
      %s172 = sphi 0, %s158
      %s176 = sphi 0, %s176
      %s178 = sphi 0, %s176
      %s179 = sphi 0, %s178
      %s193 = sphi 0, %s179
      %s197 = sphi 0, %s197
      %s199 = sphi 0, %s197
      %s200 = sphi 0, %s199
      %s214 = sphi 0, %s200
      %s224 = sphi 0, %s226
      %s227 = sphi 0, %s224
      %s228 = sphi 0, %s227
      %s244 = sphi 0, %s228
    $region4: #{tpu_custom_call.1} parent=1 // loop_header_branch
      %24 = sbr.rel (%p22) target = $region8
    $region5: #{tpu_custom_call.1} parent=1 // loop_body
      %s26 = ssub.s32 %s21, 1
      %s27 = ssub.s32 %s21, 2
      %s34 = sadd.s32 1, %s29
      %p35 = scmp.ge.s32.totalorder %s34, 2
      %s36 = scalar_select %p35, 0, %s34
      %s37 = sadd.s32 1, %s28
      %s38 = scalar_select %p35, %s37, %s28
      %p39 = scmp.ge.s32.totalorder %s38, 3
      %s40 = scalar_select %p39, 0, %s38
      %p41 = scmp.eq.s32.totalorder %s28, 1
      %s42 = scalar_select %p41, 0, %s29
      %p43 = scmp.eq.s32.totalorder %s40, 1
      %s44 = scalar_select %p43, 0, %s36
      %s45 = ssub.s32 %s42, %s44
      %p46 = scmp.eq.s32.totalorder %s45, 0
      %s48 = sadd.s32 %s47, 1
      %s49 = scalar_select %p46, %s47, %s48
      %p52 = pneg %p46
      %p53 = scmp.eq.s32.totalorder %s21, 5
      %p54 = por %p52, %p53
      %p55 = scmp.ne.s32.totalorder %s47, %s50
      %p56 = scmp.eq.s32.totalorder %s21, 0
      %p57 = por %p55, %p56
      %p58 = scmp.ne.s32.totalorder %s47, %s50
      %p59 = scmp.eq.s32.totalorder %s26, 5
      %p60 = por %p58, %p59
      %p61 = scmp.ne.s32.totalorder %s50, %s51
      %p62 = scmp.eq.s32.totalorder %s26, 0
      %p63 = por %p61, %p62
      %p64 = scmp.ne.s32.totalorder %s50, %s51
      %p65 = scmp.eq.s32.totalorder %s27, 5
      %p66 = por %p64, %p65
      %p68 = scmp.ne.s32.totalorder %s51, %s67
      %p69 = scmp.eq.s32.totalorder %s27, 0
      %p70 = por %p68, %p69
      %s72 = sadd.s32 %s71, 1
      %p75 = scmp.eq.s32.totalorder %s21, 5
      %p76 = scmp.ne.s32.totalorder %s71, %s73
      %p77 = scmp.eq.s32.totalorder %s21, 0
      %p78 = por %p76, %p77
      %p79 = scmp.ne.s32.totalorder %s71, %s73
      %p80 = scmp.eq.s32.totalorder %s26, 5
      %p81 = por %p79, %p80
      %p82 = scmp.ne.s32.totalorder %s73, %s74
      %p83 = scmp.eq.s32.totalorder %s26, 0
      %p84 = por %p82, %p83
      %p85 = scmp.ne.s32.totalorder %s73, %s74
      %p86 = scmp.eq.s32.totalorder %s27, 5
      %p87 = por %p85, %p86
      %p89 = scmp.ne.s32.totalorder %s74, %s88
      %p90 = scmp.eq.s32.totalorder %s27, 0
      %p91 = por %p89, %p90
      %s93 = sadd.s32 %s92, 1
      %p96 = scmp.eq.s32.totalorder %s21, 5
      %p97 = scmp.ne.s32.totalorder %s92, %s94
      %p98 = scmp.eq.s32.totalorder %s21, 0
      %p99 = por %p97, %p98
      %p100 = scmp.ne.s32.totalorder %s92, %s94
      %p101 = scmp.eq.s32.totalorder %s26, 5
      %p102 = por %p100, %p101
      %p103 = scmp.ne.s32.totalorder %s94, %s95
      %p104 = scmp.eq.s32.totalorder %s26, 0
      %p105 = por %p103, %p104
      %p106 = scmp.ne.s32.totalorder %s94, %s95
      %p107 = scmp.eq.s32.totalorder %s27, 5
      %p108 = por %p106, %p107
      %p110 = scmp.ne.s32.totalorder %s95, %s109
      %p111 = scmp.eq.s32.totalorder %s27, 0
      %p112 = por %p110, %p111
      %s114 = sadd.s32 %s113, 1
      %p117 = scmp.eq.s32.totalorder %s21, 5
      %p118 = scmp.ne.s32.totalorder %s113, %s115
      %p119 = scmp.eq.s32.totalorder %s21, 0
      %p120 = por %p118, %p119
      %p121 = scmp.ne.s32.totalorder %s113, %s115
      %p122 = scmp.eq.s32.totalorder %s26, 5
      %p123 = por %p121, %p122
      %p124 = scmp.ne.s32.totalorder %s115, %s116
      %p125 = scmp.eq.s32.totalorder %s26, 0
      %p126 = por %p124, %p125
      %p127 = scmp.ne.s32.totalorder %s115, %s116
      %p128 = scmp.eq.s32.totalorder %s27, 5
      %p129 = por %p127, %p128
      %p131 = scmp.ne.s32.totalorder %s116, %s130
      %p132 = scmp.eq.s32.totalorder %s27, 0
      %p133 = por %p131, %p132
      %s135 = sadd.s32 %s134, 1
      %p138 = scmp.eq.s32.totalorder %s21, 5
      %p139 = scmp.ne.s32.totalorder %s134, %s136
      %p140 = scmp.eq.s32.totalorder %s21, 0
      %p141 = por %p139, %p140
      %p142 = scmp.ne.s32.totalorder %s134, %s136
      %p143 = scmp.eq.s32.totalorder %s26, 5
      %p144 = por %p142, %p143
      %p145 = scmp.ne.s32.totalorder %s136, %s137
      %p146 = scmp.eq.s32.totalorder %s26, 0
      %p147 = por %p145, %p146
      %p148 = scmp.ne.s32.totalorder %s136, %s137
      %p149 = scmp.eq.s32.totalorder %s27, 5
      %p150 = por %p148, %p149
      %p152 = scmp.ne.s32.totalorder %s137, %s151
      %p153 = scmp.eq.s32.totalorder %s27, 0
      %p154 = por %p152, %p153
      %s156 = sadd.s32 %s155, 1
      %p159 = scmp.eq.s32.totalorder %s21, 5
      %p160 = scmp.ne.s32.totalorder %s155, %s157
      %p161 = scmp.eq.s32.totalorder %s21, 0
      %p162 = por %p160, %p161
      %p163 = scmp.ne.s32.totalorder %s155, %s157
      %p164 = scmp.eq.s32.totalorder %s26, 5
      %p165 = por %p163, %p164
      %p166 = scmp.ne.s32.totalorder %s157, %s158
      %p167 = scmp.eq.s32.totalorder %s26, 0
      %p168 = por %p166, %p167
      %p169 = scmp.ne.s32.totalorder %s157, %s158
      %p170 = scmp.eq.s32.totalorder %s27, 5
      %p171 = por %p169, %p170
      %p173 = scmp.ne.s32.totalorder %s158, %s172
      %p174 = scmp.eq.s32.totalorder %s27, 0
      %p175 = por %p173, %p174
      %s177 = sadd.s32 %s176, 1
      %p180 = scmp.eq.s32.totalorder %s21, 5
      %p181 = scmp.ne.s32.totalorder %s176, %s178
      %p182 = scmp.eq.s32.totalorder %s21, 0
      %p183 = por %p181, %p182
      %p184 = scmp.ne.s32.totalorder %s176, %s178
      %p185 = scmp.eq.s32.totalorder %s26, 5
      %p186 = por %p184, %p185
      %p187 = scmp.ne.s32.totalorder %s178, %s179
      %p188 = scmp.eq.s32.totalorder %s26, 0
      %p189 = por %p187, %p188
      %p190 = scmp.ne.s32.totalorder %s178, %s179
      %p191 = scmp.eq.s32.totalorder %s27, 5
      %p192 = por %p190, %p191
      %p194 = scmp.ne.s32.totalorder %s179, %s193
      %p195 = scmp.eq.s32.totalorder %s27, 0
      %p196 = por %p194, %p195
      %s198 = sadd.s32 %s197, 1
      %p201 = scmp.eq.s32.totalorder %s21, 5
      %p202 = scmp.ne.s32.totalorder %s197, %s199
      %p203 = scmp.eq.s32.totalorder %s21, 0
      %p204 = por %p202, %p203
      %p205 = scmp.ne.s32.totalorder %s197, %s199
      %p206 = scmp.eq.s32.totalorder %s26, 5
      %p207 = por %p205, %p206
      %p208 = scmp.ne.s32.totalorder %s199, %s200
      %p209 = scmp.eq.s32.totalorder %s26, 0
      %p210 = por %p208, %p209
      %p211 = scmp.ne.s32.totalorder %s199, %s200
      %p212 = scmp.eq.s32.totalorder %s27, 5
      %p213 = por %p211, %p212
      %p215 = scmp.ne.s32.totalorder %s200, %s214
      %p216 = scmp.eq.s32.totalorder %s27, 0
      %p217 = por %p215, %p216
      %p218 = scmp.eq.s32.totalorder %s28, 2
      %s219 = scalar_select %p218, %s29, 0
      %p220 = scmp.eq.s32.totalorder %s40, 2
      %s221 = scalar_select %p220, %s36, 0
      %s222 = ssub.s32 %s219, %s221
      %p223 = scmp.eq.s32.totalorder %s222, 0
      %s225 = sadd.s32 %s224, 1
      %s226 = scalar_select %p223, %s224, %s225
      %p229 = pneg %p223
      %p230 = scmp.eq.s32.totalorder %s21, 5
      %p231 = por %p229, %p230
      %p232 = scmp.ne.s32.totalorder %s224, %s227
      %p233 = scmp.eq.s32.totalorder %s21, 0
      %p234 = por %p232, %p233
      %p235 = scmp.ne.s32.totalorder %s224, %s227
      %p236 = scmp.eq.s32.totalorder %s26, 5
      %p237 = por %p235, %p236
      %p238 = scmp.ne.s32.totalorder %s227, %s228
      %p239 = scmp.eq.s32.totalorder %s26, 0
      %p240 = por %p238, %p239
      %p241 = scmp.ne.s32.totalorder %s227, %s228
      %p242 = scmp.eq.s32.totalorder %s27, 5
      %p243 = por %p241, %p242
      %p245 = scmp.ne.s32.totalorder %s228, %s244
      %p246 = scmp.eq.s32.totalorder %s27, 0
      %p247 = por %p245, %p246
      %p248 = scmp.le.s32.totalorder 1, %s21
      %p249 = scmp.lt.s32.totalorder %s21, 7
      %p250 = pnand %p248, %p249
      %p251 = pneg %p250
      // Predicated region
      $region9: #{tpu_custom_call.1} parent=5 // pred_check
        _
      $region10: #{tpu_custom_call.1} parent=5 // pred_check_branch
        %253 = sbr.rel (%p250) target = $region12
      $region11: #{tpu_custom_call.1} parent=5 // pred_region
        %s254 = ssub.s32 %s21, 1
        // Predicated region
        $region13: #{tpu_custom_call.1} parent=11 // pred_check
          %p255 = pneg %p84
        $region14: #{tpu_custom_call.1} parent=11 // pred_check_branch
          %257 = sbr.rel (%p255) target = $region16
        $region15: #{tpu_custom_call.1} parent=11 // pred_region
          %s259 = ssub.s32 1024, 1024
          %260 = vsyncadd [#allocation8], %s259
          %s261 = sshll.u32 [#allocation7], 4
          %s262 = int_to_ptr.vmem [resolvable:$true] %s261
          %267 = dma.hbm_to_vmem [thread:$0]  %s1, 1024, %s262, [#allocation8], 64, 64, 4
        $region16: #{tpu_custom_call.1} parent=11 // pred_fallthru
          _
        // Predicated region
        $region17: #{tpu_custom_call.1} parent=11 // pred_check
          %p268 = pneg %p105
        $region18: #{tpu_custom_call.1} parent=11 // pred_check_branch
          %270 = sbr.rel (%p268) target = $region20
        $region19: #{tpu_custom_call.1} parent=11 // pred_region
          _
        $region20: #{tpu_custom_call.1} parent=11 // pred_fallthru
          _
        // Predicated region
        $region21: #{tpu_custom_call.1} parent=11 // pred_check
          %p271 = pneg %p126
        $region22: #{tpu_custom_call.1} parent=11 // pred_check_branch
          %273 = sbr.rel (%p271) target = $region24
        $region23: #{tpu_custom_call.1} parent=11 // pred_region
          _
        $region24: #{tpu_custom_call.1} parent=11 // pred_fallthru
          _
        // Predicated region
        $region25: #{tpu_custom_call.1} parent=11 // pred_check
          %p274 = pneg %p147
        $region26: #{tpu_custom_call.1} parent=11 // pred_check_branch
          %276 = sbr.rel (%p274) target = $region28
        $region27: #{tpu_custom_call.1} parent=11 // pred_region
          _
        $region28: #{tpu_custom_call.1} parent=11 // pred_fallthru
          _
        // Predicated region
        $region29: #{tpu_custom_call.1} parent=11 // pred_check
          %p277 = pneg %p168
        $region30: #{tpu_custom_call.1} parent=11 // pred_check_branch
          %279 = sbr.rel (%p277) target = $region32
        $region31: #{tpu_custom_call.1} parent=11 // pred_region
          %s281 = ssub.s32 1024, 1024
          %282 = vsyncadd [#allocation8], %s281
          %s283 = sshll.u32 [#allocation9], 4
          %s284 = int_to_ptr.vmem [resolvable:$true] %s283
          %289 = dma.hbm_to_vmem [thread:$0]  %s5, 1024, %s284, [#allocation8], 64, 64, 4
        $region32: #{tpu_custom_call.1} parent=11 // pred_fallthru
          _
        // Predicated region
        $region33: #{tpu_custom_call.1} parent=11 // pred_check
          %p290 = pneg %p189
        $region34: #{tpu_custom_call.1} parent=11 // pred_check_branch
          %292 = sbr.rel (%p290) target = $region36
        $region35: #{tpu_custom_call.1} parent=11 // pred_region
          _
        $region36: #{tpu_custom_call.1} parent=11 // pred_fallthru
          _
        // Predicated region
        $region37: #{tpu_custom_call.1} parent=11 // pred_check
          %p293 = pneg %p210
        $region38: #{tpu_custom_call.1} parent=11 // pred_check_branch
          %295 = sbr.rel (%p293) target = $region40
        $region39: #{tpu_custom_call.1} parent=11 // pred_region
          _
        $region40: #{tpu_custom_call.1} parent=11 // pred_fallthru
          _
      $region12: #{tpu_custom_call.1} parent=5 // pred_fallthru
        _
      %p296 = scmp.lt.s32.totalorder %s21, 6
      // Predicated region
      $region41: #{tpu_custom_call.1} parent=5 // pred_check
        %p297 = pneg %p296
      $region42: #{tpu_custom_call.1} parent=5 // pred_check_branch
        %299 = sbr.rel (%p297) target = $region44
      $region43: #{tpu_custom_call.1} parent=5 // pred_region
        // Predicated region
        $region45: #{tpu_custom_call.1} parent=43 // pred_check
          %p300 = pneg %p57
        $region46: #{tpu_custom_call.1} parent=43 // pred_check_branch
          %302 = sbr.rel (%p300) target = $region48
        $region47: #{tpu_custom_call.1} parent=43 // pred_region
          %s303 = sand.u32 %s47, 1
          %s304 = scalar_lea.sflag [#allocation5], %s303
          %s305 = sand.u32 %s47, 1
          %s306 = smul.addr %s305, 64
          %s307 = scalar_lea.vmem [#allocation4], %s306
          %p308 = scmp.eq.s32.totalorder %s28, 1
          %s309 = scalar_select %p308, 0, %s29
          %s310 = smul.u32 16, %s309
          %s312 = ssub.s32 1024, 1024
          %313 = vsyncadd %s304, %s312
          %s314 = smul.addr %s310, 64
          %s315 = scalar_lea.hbm %s0, %s314
          %s316 = sshll.u32 %s307, 4
          %s317 = int_to_ptr.vmem [resolvable:$true] %s316
          %322 = dma.hbm_to_vmem [thread:$0]  %s315, 1024, %s317, %s304, 64, 64, 4
        $region48: #{tpu_custom_call.1} parent=43 // pred_fallthru
          _
      $region44: #{tpu_custom_call.1} parent=5 // pred_fallthru
        _
      %p323 = scmp.le.s32.totalorder 1, %s21
      %p324 = scmp.lt.s32.totalorder %s21, 7
      %p325 = pnand %p323, %p324
      %p326 = pneg %p325
      // Predicated region
      $region49: #{tpu_custom_call.1} parent=5 // pred_check
        _
      $region50: #{tpu_custom_call.1} parent=5 // pred_check_branch
        %328 = sbr.rel (%p325) target = $region52
      $region51: #{tpu_custom_call.1} parent=5 // pred_region
        %s329 = ssub.s32 %s21, 1
        %s330 = sand.u32 %s50, 1
        %s331 = scalar_lea.sflag [#allocation5], %s330
        %s332 = sand.u32 %s50, 1
        %s333 = smul.addr %s332, 64
        %s334 = scalar_lea.vmem [#allocation4], %s333
        // Predicated region
        $region53: #{tpu_custom_call.1} parent=51 // pred_check
          %p335 = pneg %p63
        $region54: #{tpu_custom_call.1} parent=51 // pred_check_branch
          %337 = sbr.rel (%p335) target = $region56
        $region55: #{tpu_custom_call.1} parent=51 // pred_region
          %338 = dma.done %s331, 1024
        $region56: #{tpu_custom_call.1} parent=51 // pred_fallthru
          _
        // Predicated region
        $region57: #{tpu_custom_call.1} parent=51 // pred_check
          %p339 = pneg %p84
        $region58: #{tpu_custom_call.1} parent=51 // pred_check_branch
          %341 = sbr.rel (%p339) target = $region60
        $region59: #{tpu_custom_call.1} parent=51 // pred_region
          %342 = dma.done [#allocation8], 1024
        $region60: #{tpu_custom_call.1} parent=51 // pred_fallthru
          _
        // Predicated region
        $region61: #{tpu_custom_call.1} parent=51 // pred_check
          %p343 = pneg %p168
        $region62: #{tpu_custom_call.1} parent=51 // pred_check_branch
          %345 = sbr.rel (%p343) target = $region64
        $region63: #{tpu_custom_call.1} parent=51 // pred_region
          %346 = dma.done [#allocation8], 1024
        $region64: #{tpu_custom_call.1} parent=51 // pred_fallthru
          _
        %s347 = sand.u32 %s50, 1
        %s348 = scalar_lea.sflag [#allocation5], %s347
        %s349 = sand.u32 %s50, 1
        %s350 = smul.addr %s349, 64
        %s351 = scalar_lea.vmem [#allocation4], %s350
        %p352 = pneg %p63
        %p353 = pneg %p60
        %p354 = pneg %p84
        %p355 = pneg %p81
        %p356 = pneg %p105
        %p357 = pneg %p102
        %p358 = pneg %p126
        %p359 = pneg %p123
        %p360 = pneg %p147
        %p361 = pneg %p144
        %p362 = pneg %p168
        %p363 = pneg %p165
        %p364 = pneg %p189
        %p365 = pneg %p186
        %p366 = pneg %p210
        %p367 = pneg %p207
        %p368 = pneg %p240
        %p369 = pneg %p237
        %s370 = sand.u32 %s227, 1
        %s371 = scalar_lea.sflag [#allocation6], %s370
        %s372 = sand.u32 %s227, 1
        %s373 = smul.addr %s372, 128
        %s374 = scalar_lea.vmem [#allocation10], %s373
        %p375 = scmp.eq.s32.totalorder %s30, 1
        %s376 = scalar_select %p375, 0, %s31
        %s377 = smul.u32 16, %s376
        %p378 = scmp.eq.s32.totalorder %s30, 2
        %s379 = scalar_select %p378, %s31, 0
        %s380 = smul.u32 16, %s379
        %s382 = smul.u32 %s31, 128
        %p383 = scmp.eq.s32.totalorder %s30, 0
        %p384 = scmp.eq.s32.totalorder %s31, 0
        %p385 = pnand %p383, %p384
        %p386 = pneg %p385
        // Predicated region
        $region65: #{tpu_custom_call.1} parent=51 // pred_check
          _
        $region66: #{tpu_custom_call.1} parent=51 // pred_check_branch
          %388 = sbr.rel (%p385) target = $region68
        $region67: #{tpu_custom_call.1} parent=51 // pred_region
          %389 = vst [vmem:[#allocation3] sm:$0xff] 0.0
        $region68: #{tpu_custom_call.1} parent=51 // pred_fallthru
          _
        // Predicated region
        $region69: #{tpu_custom_call.1} parent=51 // pred_check
          %p390 = pneg %p383
        $region70: #{tpu_custom_call.1} parent=51 // pred_check_branch
          %392 = sbr.rel (%p390) target = $region72
        $region71: #{tpu_custom_call.1} parent=51 // pred_region
          %v393 = vld [vmem:[#allocation7] sm:$0xf]
          %v394 = vld [vmem:[#allocation7 + $0x4] sm:$0xf]
          %v395 = vld [vmem:[#allocation7 + $0x8] sm:$0xf]
          %v396 = vld [vmem:[#allocation7 + $0xc] sm:$0xf]
          %v397 = vld [vmem:[#allocation7 + $0x10] sm:$0xf]
          %v398 = vld [vmem:[#allocation7 + $0x14] sm:$0xf]
          %v399 = vld [vmem:[#allocation7 + $0x18] sm:$0xf]
          %v400 = vld [vmem:[#allocation7 + $0x1c] sm:$0xf]
          %v401 = vld [vmem:[#allocation7 + $0x20] sm:$0xf]
          %v402 = vld [vmem:[#allocation7 + $0x24] sm:$0xf]
          %v403 = vld [vmem:[#allocation7 + $0x28] sm:$0xf]
          %v404 = vld [vmem:[#allocation7 + $0x2c] sm:$0xf]
          %v405 = vld [vmem:[#allocation7 + $0x30] sm:$0xf]
          %v406 = vld [vmem:[#allocation7 + $0x34] sm:$0xf]
          %v407 = vld [vmem:[#allocation7 + $0x38] sm:$0xf]
          %v408 = vld [vmem:[#allocation7 + $0x3c] sm:$0xf]
          %v409 = vld [vmem:[%s334] sm:$0xf]
          %v410 = vld [vmem:[%s334 + $0x4] sm:$0xf]
          %v411 = vld [vmem:[%s334 + $0x8] sm:$0xf]
          %v412 = vld [vmem:[%s334 + $0xc] sm:$0xf]
          %v413 = vld [vmem:[%s334 + $0x10] sm:$0xf]
          %v414 = vld [vmem:[%s334 + $0x14] sm:$0xf]
          %v415 = vld [vmem:[%s334 + $0x18] sm:$0xf]
          %v416 = vld [vmem:[%s334 + $0x1c] sm:$0xf]
          %v417 = vld [vmem:[%s334 + $0x20] sm:$0xf]
          %v418 = vld [vmem:[%s334 + $0x24] sm:$0xf]
          %v419 = vld [vmem:[%s334 + $0x28] sm:$0xf]
          %v420 = vld [vmem:[%s334 + $0x2c] sm:$0xf]
          %v421 = vld [vmem:[%s334 + $0x30] sm:$0xf]
          %v422 = vld [vmem:[%s334 + $0x34] sm:$0xf]
          %v423 = vld [vmem:[%s334 + $0x38] sm:$0xf]
          %v424 = vld [vmem:[%s334 + $0x3c] sm:$0xf]
          %v425 = vld [vmem:[%s2] sm:$0x1]
          %v427 = vlaneseq
          %v428 = vshrl.u32 %v427, 7
          %v429 = vsub.s32 0, %v428
          %v430 = vrot.slane %v425, %v429
          %v448 = vunpack.c.l.b16 %v409
          %v449 = vunpack.c.l.b16 %v410
          %v450 = vunpack.c.l.b16 %v411
          %v451 = vunpack.c.l.b16 %v412
          %v452 = vunpack.c.l.b16 %v413
          %v453 = vunpack.c.l.b16 %v414
          %v454 = vunpack.c.l.b16 %v415
          %v455 = vunpack.c.l.b16 %v416
          %v456 = vunpack.c.l.b16 %v417
          %v457 = vunpack.c.l.b16 %v418
          %v458 = vunpack.c.l.b16 %v419
          %v459 = vunpack.c.l.b16 %v420
          %v460 = vunpack.c.l.b16 %v421
          %v461 = vunpack.c.l.b16 %v422
          %v462 = vunpack.c.l.b16 %v423
          %v463 = vunpack.c.l.b16 %v424
          %v464 = vpack.c.b16 %v449, %v448
          %v465 = vpack.c.b16 %v451, %v450
          %v466 = vpack.c.b16 %v453, %v452
          %v467 = vpack.c.b16 %v455, %v454
          %v468 = vpack.c.b16 %v457, %v456
          %v469 = vpack.c.b16 %v459, %v458
          %v470 = vpack.c.b16 %v461, %v460
          %v471 = vpack.c.b16 %v463, %v462
          %v496 = vunpack.c.l.b16 %v393
          %v497 = vunpack.c.l.b16 %v394
          %v498 = vunpack.c.l.b16 %v395
          %v499 = vunpack.c.l.b16 %v396
          %v500 = vunpack.c.l.b16 %v397
          %v501 = vunpack.c.l.b16 %v398
          %v502 = vunpack.c.l.b16 %v399
          %v503 = vunpack.c.l.b16 %v400
          %v504 = vunpack.c.l.b16 %v401
          %v505 = vunpack.c.l.b16 %v402
          %v506 = vunpack.c.l.b16 %v403
          %v507 = vunpack.c.l.b16 %v404
          %v508 = vunpack.c.l.b16 %v405
          %v509 = vunpack.c.l.b16 %v406
          %v510 = vunpack.c.l.b16 %v407
          %v511 = vunpack.c.l.b16 %v408
          %v512 = vpack.c.b16 %v497, %v496
          %v513 = vpack.c.b16 %v499, %v498
          %v514 = vpack.c.b16 %v501, %v500
          %v515 = vpack.c.b16 %v503, %v502
          %v516 = vpack.c.b16 %v505, %v504
          %v517 = vpack.c.b16 %v507, %v506
          %v518 = vpack.c.b16 %v509, %v508
          %v519 = vpack.c.b16 %v511, %v510
          %528 = vmatprep.subr.bf16.mxu0 0
          %529 = vmatpush1.bf16.msra.mxu0 %v519
          %530 = vmatprep.subr.bf16.mxu0 0
          %531 = vmatpush1.bf16.msra.mxu0 %v518
          %532 = vmatprep.subr.bf16.mxu0 0
          %533 = vmatpush1.bf16.msra.mxu0 %v517
          %534 = vmatprep.subr.bf16.mxu0 0
          %535 = vmatpush1.bf16.msra.mxu0 %v516
          %536 = vmatprep.subr.bf16.mxu0 0
          %537 = vmatpush1.bf16.msra.mxu0 %v515
          %538 = vmatprep.subr.bf16.mxu0 0
          %539 = vmatpush1.bf16.msra.mxu0 %v514
          %540 = vmatprep.subr.bf16.mxu0 0
          %541 = vmatpush1.bf16.msra.mxu0 %v513
          %542 = vmatprep.subr.bf16.mxu0 0
          %543 = vmatpush1.bf16.msra.mxu0 %v512
          %544 = vmatprep.subr.bf16.mxu0 0
          %545 = vmatpush2.bf16.msra.mxu0 0
          %546 = vmatprep.subr.bf16.mxu0 0
          %547 = vmatpush2.bf16.msra.mxu0 0
          %548 = vmatprep.subr.bf16.mxu0 0
          %549 = vmatpush2.bf16.msra.mxu0 0
          %550 = vmatprep.subr.bf16.mxu0 0
          %551 = vmatpush2.bf16.msra.mxu0 0
          %552 = vmatprep.subr.bf16.mxu0 0
          %553 = vmatpush2.bf16.msra.mxu0 0
          %554 = vmatprep.subr.bf16.mxu0 0
          %555 = vmatpush2.bf16.msra.mxu0 0
          %556 = vmatprep.subr.bf16.mxu0 0
          %557 = vmatpush2.bf16.msra.mxu0 0
          %558 = vmatprep.subr.bf16.mxu0 0
          %559 = vmatpush2.bf16.msra.mxu0 0
          %560 = vmatprep.mubr.bf16.mxu0 0
          %561 = vmatmul.mubr.bf16.gmra.mxu0 %v464
          %v562 = vpop.f32.mrf.mxu0
          %v563 = vadd.f32 %v430, %v562
          %v564 = vpop.f32.mrf.mxu0
          %v565 = vpop.f32.mrf.mxu0
          %v566 = vadd.f32 %v430, %v565
          %v567 = vpop.f32.mrf.mxu0
          %568 = vmatprep.mubr.bf16.mxu0 0
          %569 = vmatmul.mubr.bf16.gmra.mxu0 %v465
          %v570 = vpop.f32.mrf.mxu0
          %v571 = vadd.f32 %v430, %v570
          %v572 = vpop.f32.mrf.mxu0
          %v573 = vpop.f32.mrf.mxu0
          %v574 = vadd.f32 %v430, %v573
          %v575 = vpop.f32.mrf.mxu0
          %576 = vmatprep.mubr.bf16.mxu0 0
          %577 = vmatmul.mubr.bf16.gmra.mxu0 %v466
          %v578 = vpop.f32.mrf.mxu0
          %v579 = vadd.f32 %v430, %v578
          %v580 = vpop.f32.mrf.mxu0
          %v581 = vpop.f32.mrf.mxu0
          %v582 = vadd.f32 %v430, %v581
          %v583 = vpop.f32.mrf.mxu0
          %584 = vmatprep.mubr.bf16.mxu0 0
          %585 = vmatmul.mubr.bf16.gmra.mxu0 %v467
          %v586 = vpop.f32.mrf.mxu0
          %v587 = vadd.f32 %v430, %v586
          %v588 = vpop.f32.mrf.mxu0
          %v589 = vpop.f32.mrf.mxu0
          %v590 = vadd.f32 %v430, %v589
          %v591 = vpop.f32.mrf.mxu0
          %592 = vmatprep.mubr.bf16.mxu0 0
          %593 = vmatmul.mubr.bf16.gmra.mxu0 %v468
          %v594 = vpop.f32.mrf.mxu0
          %v595 = vadd.f32 %v430, %v594
          %v596 = vpop.f32.mrf.mxu0
          %v597 = vpop.f32.mrf.mxu0
          %v598 = vadd.f32 %v430, %v597
          %v599 = vpop.f32.mrf.mxu0
          %600 = vmatprep.mubr.bf16.mxu0 0
          %601 = vmatmul.mubr.bf16.gmra.mxu0 %v469
          %v602 = vpop.f32.mrf.mxu0
          %v603 = vadd.f32 %v430, %v602
          %v604 = vpop.f32.mrf.mxu0
          %v605 = vpop.f32.mrf.mxu0
          %v606 = vadd.f32 %v430, %v605
          %v607 = vpop.f32.mrf.mxu0
          %608 = vmatprep.mubr.bf16.mxu0 0
          %609 = vmatmul.mubr.bf16.gmra.mxu0 %v470
          %v610 = vpop.f32.mrf.mxu0
          %v611 = vadd.f32 %v430, %v610
          %v612 = vpop.f32.mrf.mxu0
          %v613 = vpop.f32.mrf.mxu0
          %v614 = vadd.f32 %v430, %v613
          %v615 = vpop.f32.mrf.mxu0
          %616 = vmatprep.mubr.bf16.mxu0 0
          %617 = vmatmul.mubr.bf16.gmra.mxu0 %v471
          %v618 = vpop.f32.mrf.mxu0
          %v619 = vadd.f32 %v430, %v618
          %v620 = vpop.f32.mrf.mxu0
          %v621 = vpop.f32.mrf.mxu0
          %v622 = vadd.f32 %v430, %v621
          %v623 = vpop.f32.mrf.mxu0
          %624 = vdwg.mxu0
          %vm625 = vcmp.gt.f32.partialorder %v563, 0.0
          %vm626 = vcmp.gt.f32.partialorder %v566, 0.0
          %vm627 = vcmp.gt.f32.partialorder %v571, 0.0
          %vm628 = vcmp.gt.f32.partialorder %v574, 0.0
          %vm629 = vcmp.gt.f32.partialorder %v579, 0.0
          %vm630 = vcmp.gt.f32.partialorder %v582, 0.0
          %vm631 = vcmp.gt.f32.partialorder %v587, 0.0
          %vm632 = vcmp.gt.f32.partialorder %v590, 0.0
          %vm633 = vcmp.gt.f32.partialorder %v595, 0.0
          %vm634 = vcmp.gt.f32.partialorder %v598, 0.0
          %vm635 = vcmp.gt.f32.partialorder %v603, 0.0
          %vm636 = vcmp.gt.f32.partialorder %v606, 0.0
          %vm637 = vcmp.gt.f32.partialorder %v611, 0.0
          %vm638 = vcmp.gt.f32.partialorder %v614, 0.0
          %vm639 = vcmp.gt.f32.partialorder %v619, 0.0
          %vm640 = vcmp.gt.f32.partialorder %v622, 0.0
          %v641 = vmul.f32 %v563, 1.442695
          %v642 = vpow.pop %v641
          %v643 = vmul.f32 %v566, 1.442695
          %v644 = vpow.pop %v643
          %v645 = vmul.f32 %v571, 1.442695
          %v646 = vpow.pop %v645
          %v647 = vmul.f32 %v574, 1.442695
          %v648 = vpow.pop %v647
          %v649 = vmul.f32 %v579, 1.442695
          %v650 = vpow.pop %v649
          %v651 = vmul.f32 %v582, 1.442695
          %v652 = vpow.pop %v651
          %v653 = vmul.f32 %v587, 1.442695
          %v654 = vpow.pop %v653
          %v655 = vmul.f32 %v590, 1.442695
          %v656 = vpow.pop %v655
          %v657 = vmul.f32 %v595, 1.442695
          %v658 = vpow.pop %v657
          %v659 = vmul.f32 %v598, 1.442695
          %v660 = vpow.pop %v659
          %v661 = vmul.f32 %v603, 1.442695
          %v662 = vpow.pop %v661
          %v663 = vmul.f32 %v606, 1.442695
          %v664 = vpow.pop %v663
          %v665 = vmul.f32 %v611, 1.442695
          %v666 = vpow.pop %v665
          %v667 = vmul.f32 %v614, 1.442695
          %v668 = vpow.pop %v667
          %v669 = vmul.f32 %v619, 1.442695
          %v670 = vpow.pop %v669
          %v671 = vmul.f32 %v622, 1.442695
          %v672 = vpow.pop %v671
          %v673 = vsub.f32 %v642, 1.0
          %v674 = vsub.f32 %v644, 1.0
          %v675 = vsub.f32 %v646, 1.0
          %v676 = vsub.f32 %v648, 1.0
          %v677 = vsub.f32 %v650, 1.0
          %v678 = vsub.f32 %v652, 1.0
          %v679 = vsub.f32 %v654, 1.0
          %v680 = vsub.f32 %v656, 1.0
          %v681 = vsub.f32 %v658, 1.0
          %v682 = vsub.f32 %v660, 1.0
          %v683 = vsub.f32 %v662, 1.0
          %v684 = vsub.f32 %v664, 1.0
          %v685 = vsub.f32 %v666, 1.0
          %v686 = vsub.f32 %v668, 1.0
          %v687 = vsub.f32 %v670, 1.0
          %v688 = vsub.f32 %v672, 1.0
          %v689 = vmul.f32 %v673, 1.6732632
          %v690 = vmul.f32 %v674, 1.6732632
          %v691 = vmul.f32 %v675, 1.6732632
          %v692 = vmul.f32 %v676, 1.6732632
          %v693 = vmul.f32 %v677, 1.6732632
          %v694 = vmul.f32 %v678, 1.6732632
          %v695 = vmul.f32 %v679, 1.6732632
          %v696 = vmul.f32 %v680, 1.6732632
          %v697 = vmul.f32 %v681, 1.6732632
          %v698 = vmul.f32 %v682, 1.6732632
          %v699 = vmul.f32 %v683, 1.6732632
          %v700 = vmul.f32 %v684, 1.6732632
          %v701 = vmul.f32 %v685, 1.6732632
          %v702 = vmul.f32 %v686, 1.6732632
          %v703 = vmul.f32 %v687, 1.6732632
          %v704 = vmul.f32 %v688, 1.6732632
          %v705 = vsel %vm625, %v563, %v689
          %v706 = vsel %vm626, %v566, %v690
          %v707 = vsel %vm627, %v571, %v691
          %v708 = vsel %vm628, %v574, %v692
          %v709 = vsel %vm629, %v579, %v693
          %v710 = vsel %vm630, %v582, %v694
          %v711 = vsel %vm631, %v587, %v695
          %v712 = vsel %vm632, %v590, %v696
          %v713 = vsel %vm633, %v595, %v697
          %v714 = vsel %vm634, %v598, %v698
          %v715 = vsel %vm635, %v603, %v699
          %v716 = vsel %vm636, %v606, %v700
          %v717 = vsel %vm637, %v611, %v701
          %v718 = vsel %vm638, %v614, %v702
          %v719 = vsel %vm639, %v619, %v703
          %v720 = vsel %vm640, %v622, %v704
          %v721 = vmul.f32 %v705, 1.050701
          %v722 = vmul.f32 %v706, 1.050701
          %v723 = vmul.f32 %v707, 1.050701
          %v724 = vmul.f32 %v708, 1.050701
          %v725 = vmul.f32 %v709, 1.050701
          %v726 = vmul.f32 %v710, 1.050701
          %v727 = vmul.f32 %v711, 1.050701
          %v728 = vmul.f32 %v712, 1.050701
          %v729 = vmul.f32 %v713, 1.050701
          %v730 = vmul.f32 %v714, 1.050701
          %v731 = vmul.f32 %v715, 1.050701
          %v732 = vmul.f32 %v716, 1.050701
          %v733 = vmul.f32 %v717, 1.050701
          %v734 = vmul.f32 %v718, 1.050701
          %v735 = vmul.f32 %v719, 1.050701
          %v736 = vmul.f32 %v720, 1.050701
          %s737 = scalar_lea.vmem [#allocation2], %s382
          %738 = vst [vmem:[%s737] sm:$0xff] %v721
          %739 = vst [vmem:[%s737 + $0x8] sm:$0xff] %v722
          %740 = vst [vmem:[%s737 + $0x10] sm:$0xff] %v723
          %741 = vst [vmem:[%s737 + $0x18] sm:$0xff] %v724
          %742 = vst [vmem:[%s737 + $0x20] sm:$0xff] %v725
          %743 = vst [vmem:[%s737 + $0x28] sm:$0xff] %v726
          %744 = vst [vmem:[%s737 + $0x30] sm:$0xff] %v727
          %745 = vst [vmem:[%s737 + $0x38] sm:$0xff] %v728
          %746 = vst [vmem:[%s737 + $0x40] sm:$0xff] %v729
          %747 = vst [vmem:[%s737 + $0x48] sm:$0xff] %v730
          %748 = vst [vmem:[%s737 + $0x50] sm:$0xff] %v731
          %749 = vst [vmem:[%s737 + $0x58] sm:$0xff] %v732
          %750 = vst [vmem:[%s737 + $0x60] sm:$0xff] %v733
          %751 = vst [vmem:[%s737 + $0x68] sm:$0xff] %v734
          %752 = vst [vmem:[%s737 + $0x70] sm:$0xff] %v735
          %753 = vst [vmem:[%s737 + $0x78] sm:$0xff] %v736
          %v754 = vadd.f32 %v721, %v722
          %v755 = vadd.f32 %v754, %v723
          %v756 = vadd.f32 %v755, %v724
          %v757 = vadd.f32 %v756, %v725
          %v758 = vadd.f32 %v757, %v726
          %v759 = vadd.f32 %v758, %v727
          %v760 = vadd.f32 %v759, %v728
          %v761 = vadd.f32 %v760, %v729
          %v762 = vadd.f32 %v761, %v730
          %v763 = vadd.f32 %v762, %v731
          %v764 = vadd.f32 %v763, %v732
          %v765 = vadd.f32 %v764, %v733
          %v766 = vadd.f32 %v765, %v734
          %v767 = vadd.f32 %v766, %v735
          %v768 = vadd.f32 %v767, %v736
          %v769 = vrot.slane %v768, 4
          %v770 = vadd.f32 %v768, %v769
          %v771 = vrot.slane %v770, 2
          %v772 = vadd.f32 %v770, %v771
          %v773 = vrot.slane %v772, 1
          %v774 = vadd.f32 %v772, %v773
          %v775 = vmul.f32 %v721, %v721
          %v776 = vmul.f32 %v722, %v722
          %v777 = vmul.f32 %v723, %v723
          %v778 = vmul.f32 %v724, %v724
          %v779 = vmul.f32 %v725, %v725
          %v780 = vmul.f32 %v726, %v726
          %v781 = vmul.f32 %v727, %v727
          %v782 = vmul.f32 %v728, %v728
          %v783 = vmul.f32 %v729, %v729
          %v784 = vmul.f32 %v730, %v730
          %v785 = vmul.f32 %v731, %v731
          %v786 = vmul.f32 %v732, %v732
          %v787 = vmul.f32 %v733, %v733
          %v788 = vmul.f32 %v734, %v734
          %v789 = vmul.f32 %v735, %v735
          %v790 = vmul.f32 %v736, %v736
          %v791 = vadd.f32 %v775, %v776
          %v792 = vadd.f32 %v791, %v777
          %v793 = vadd.f32 %v792, %v778
          %v794 = vadd.f32 %v793, %v779
          %v795 = vadd.f32 %v794, %v780
          %v796 = vadd.f32 %v795, %v781
          %v797 = vadd.f32 %v796, %v782
          %v798 = vadd.f32 %v797, %v783
          %v799 = vadd.f32 %v798, %v784
          %v800 = vadd.f32 %v799, %v785
          %v801 = vadd.f32 %v800, %v786
          %v802 = vadd.f32 %v801, %v787
          %v803 = vadd.f32 %v802, %v788
          %v804 = vadd.f32 %v803, %v789
          %v805 = vadd.f32 %v804, %v790
          %v806 = vrot.slane %v805, 4
          %v807 = vadd.f32 %v805, %v806
          %v808 = vrot.slane %v807, 2
          %v809 = vadd.f32 %v807, %v808
          %v810 = vrot.slane %v809, 1
          %v811 = vadd.f32 %v809, %v810
          %v812 = vld [vmem:[#allocation3] sm:$0x3]
          %vm813 = vcmask 1040384
          %v814 = vsel %vm813, %v774, %v811
          %v815 = vadd.f32 %v812, %v814
          %816 = vst [vmem:[#allocation3] sm:$0x3] %v815
        $region72: #{tpu_custom_call.1} parent=51 // pred_fallthru
          _
        %p817 = scmp.eq.s32.totalorder %s30, 1
        // Predicated region
        $region73: #{tpu_custom_call.1} parent=51 // pred_check
          %p818 = pneg %p817
        $region74: #{tpu_custom_call.1} parent=51 // pred_check_branch
          %820 = sbr.rel (%p818) target = $region76
        $region75: #{tpu_custom_call.1} parent=51 // pred_region
          // Predicated region
          $region77: #{tpu_custom_call.1} parent=75 // pred_check
            %p821 = pneg %p384
          $region78: #{tpu_custom_call.1} parent=75 // pred_check_branch
            %823 = sbr.rel (%p821) target = $region80
          $region79: #{tpu_custom_call.1} parent=75 // pred_region
            %v824 = vld [vmem:[#allocation3] sm:$0x1]
            %v825 = vmul.f32 %v824, 0.00390625
            %v826 = vld [vmem:[#allocation3 + $0x1] sm:$0x1]
            %v827 = vmul.f32 %v826, 0.00390625
            %v828 = vmul.f32 %v825, %v825
            %v829 = vsub.f32 %v827, %v828
            %v830 = vld [vmem:[%s3] sm:$0x1]
            %v831 = vadd.f32 %v829, 1e-05
            %v832 = vrsqrt.pop %v831
            %v833 = vmul.f32 %v830, %v832
            %v834 = vld [vmem:[%s4] sm:$0x1]
            %v835 = vmul.f32 %v825, %v833
            %v836 = vsub.f32 %v834, %v835
            %v838 = vlaneseq
            %v839 = vshrl.u32 %v838, 7
            %v840 = vsub.s32 0, %v839
            %v841 = vrot.slane %v836, %v840
            %vm843 = vcmask 1040384
            %v844 = vsel %vm843, %v833, %v841
            %845 = vst [vmem:[#allocation3 + $0x4] sm:$0x3] %v844
          $region80: #{tpu_custom_call.1} parent=75 // pred_fallthru
            _
          %s846 = scalar_lea.vmem [#allocation2], %s382
          %v847 = vld [vmem:[%s846] sm:$0xff]
          %v848 = vld [vmem:[%s846 + $0x8] sm:$0xff]
          %v849 = vld [vmem:[%s846 + $0x10] sm:$0xff]
          %v850 = vld [vmem:[%s846 + $0x18] sm:$0xff]
          %v851 = vld [vmem:[%s846 + $0x20] sm:$0xff]
          %v852 = vld [vmem:[%s846 + $0x28] sm:$0xff]
          %v853 = vld [vmem:[%s846 + $0x30] sm:$0xff]
          %v854 = vld [vmem:[%s846 + $0x38] sm:$0xff]
          %v855 = vld [vmem:[%s846 + $0x40] sm:$0xff]
          %v856 = vld [vmem:[%s846 + $0x48] sm:$0xff]
          %v857 = vld [vmem:[%s846 + $0x50] sm:$0xff]
          %v858 = vld [vmem:[%s846 + $0x58] sm:$0xff]
          %v859 = vld [vmem:[%s846 + $0x60] sm:$0xff]
          %v860 = vld [vmem:[%s846 + $0x68] sm:$0xff]
          %v861 = vld [vmem:[%s846 + $0x70] sm:$0xff]
          %v862 = vld [vmem:[%s846 + $0x78] sm:$0xff]
          %v863 = vld [vmem:[#allocation3 + $0x4] sm:$0x1]
          %v864 = vlaneseq
          %v865 = vshrl.u32 %v864, 7
          %v866 = vsub.s32 0, %v865
          %v867 = vrot.slane %v863, %v866
          %v868 = vmul.f32 %v847, %v867
          %v869 = vmul.f32 %v848, %v867
          %v870 = vmul.f32 %v849, %v867
          %v871 = vmul.f32 %v850, %v867
          %v872 = vmul.f32 %v851, %v867
          %v873 = vmul.f32 %v852, %v867
          %v874 = vmul.f32 %v853, %v867
          %v875 = vmul.f32 %v854, %v867
          %v876 = vmul.f32 %v855, %v867
          %v877 = vmul.f32 %v856, %v867
          %v878 = vmul.f32 %v857, %v867
          %v879 = vmul.f32 %v858, %v867
          %v880 = vmul.f32 %v859, %v867
          %v881 = vmul.f32 %v860, %v867
          %v882 = vmul.f32 %v861, %v867
          %v883 = vmul.f32 %v862, %v867
          %v884 = vld [vmem:[#allocation3 + $0x5] sm:$0x1]
          %v885 = vlaneseq
          %v886 = vshrl.u32 %v885, 7
          %v887 = vsub.s32 0, %v886
          %v888 = vrot.slane %v884, %v887
          %v889 = vadd.f32 %v868, %v888
          %v890 = vadd.f32 %v869, %v888
          %v891 = vadd.f32 %v870, %v888
          %v892 = vadd.f32 %v871, %v888
          %v893 = vadd.f32 %v872, %v888
          %v894 = vadd.f32 %v873, %v888
          %v895 = vadd.f32 %v874, %v888
          %v896 = vadd.f32 %v875, %v888
          %v897 = vadd.f32 %v876, %v888
          %v898 = vadd.f32 %v877, %v888
          %v899 = vadd.f32 %v878, %v888
          %v900 = vadd.f32 %v879, %v888
          %v901 = vadd.f32 %v880, %v888
          %v902 = vadd.f32 %v881, %v888
          %v903 = vadd.f32 %v882, %v888
          %v904 = vadd.f32 %v883, %v888
          %v905 = vld [vmem:[#allocation9] sm:$0xf]
          %v906 = vld [vmem:[#allocation9 + $0x4] sm:$0xf]
          %v907 = vld [vmem:[#allocation9 + $0x8] sm:$0xf]
          %v908 = vld [vmem:[#allocation9 + $0xc] sm:$0xf]
          %v909 = vld [vmem:[#allocation9 + $0x10] sm:$0xf]
          %v910 = vld [vmem:[#allocation9 + $0x14] sm:$0xf]
          %v911 = vld [vmem:[#allocation9 + $0x18] sm:$0xf]
          %v912 = vld [vmem:[#allocation9 + $0x1c] sm:$0xf]
          %v913 = vld [vmem:[#allocation9 + $0x20] sm:$0xf]
          %v914 = vld [vmem:[#allocation9 + $0x24] sm:$0xf]
          %v915 = vld [vmem:[#allocation9 + $0x28] sm:$0xf]
          %v916 = vld [vmem:[#allocation9 + $0x2c] sm:$0xf]
          %v917 = vld [vmem:[#allocation9 + $0x30] sm:$0xf]
          %v918 = vld [vmem:[#allocation9 + $0x34] sm:$0xf]
          %v919 = vld [vmem:[#allocation9 + $0x38] sm:$0xf]
          %v920 = vld [vmem:[#allocation9 + $0x3c] sm:$0xf]
          %v921 = vpack.c.bf16 %v890, %v889
          %v922 = vpack.c.bf16 %v892, %v891
          %v923 = vpack.c.bf16 %v894, %v893
          %v924 = vpack.c.bf16 %v896, %v895
          %v925 = vpack.c.bf16 %v898, %v897
          %v926 = vpack.c.bf16 %v900, %v899
          %v927 = vpack.c.bf16 %v902, %v901
          %v928 = vpack.c.bf16 %v904, %v903
          %v945 = vunpack.c.l.b16 %v905
          %v946 = vunpack.c.l.b16 %v906
          %v947 = vunpack.c.l.b16 %v907
          %v948 = vunpack.c.l.b16 %v908
          %v949 = vunpack.c.l.b16 %v909
          %v950 = vunpack.c.l.b16 %v910
          %v951 = vunpack.c.l.b16 %v911
          %v952 = vunpack.c.l.b16 %v912
          %v953 = vunpack.c.l.b16 %v913
          %v954 = vunpack.c.l.b16 %v914
          %v955 = vunpack.c.l.b16 %v915
          %v956 = vunpack.c.l.b16 %v916
          %v957 = vunpack.c.l.b16 %v917
          %v958 = vunpack.c.l.b16 %v918
          %v959 = vunpack.c.l.b16 %v919
          %v960 = vunpack.c.l.b16 %v920
          %v961 = vpack.c.b16 %v946, %v945
          %v962 = vpack.c.b16 %v948, %v947
          %v963 = vpack.c.b16 %v950, %v949
          %v964 = vpack.c.b16 %v952, %v951
          %v965 = vpack.c.b16 %v954, %v953
          %v966 = vpack.c.b16 %v956, %v955
          %v967 = vpack.c.b16 %v958, %v957
          %v968 = vpack.c.b16 %v960, %v959
          %977 = vmatprep.subr.bf16.mxu0 0
          %978 = vmatpush1.bf16.msra.mxu0 %v968
          %979 = vmatprep.subr.bf16.mxu0 0
          %980 = vmatpush1.bf16.msra.mxu0 %v967
          %981 = vmatprep.subr.bf16.mxu0 0
          %982 = vmatpush1.bf16.msra.mxu0 %v966
          %983 = vmatprep.subr.bf16.mxu0 0
          %984 = vmatpush1.bf16.msra.mxu0 %v965
          %985 = vmatprep.subr.bf16.mxu0 0
          %986 = vmatpush1.bf16.msra.mxu0 %v964
          %987 = vmatprep.subr.bf16.mxu0 0
          %988 = vmatpush1.bf16.msra.mxu0 %v963
          %989 = vmatprep.subr.bf16.mxu0 0
          %990 = vmatpush1.bf16.msra.mxu0 %v962
          %991 = vmatprep.subr.bf16.mxu0 0
          %992 = vmatpush1.bf16.msra.mxu0 %v961
          %993 = vmatprep.subr.bf16.mxu0 0
          %994 = vmatpush2.bf16.msra.mxu0 0
          %995 = vmatprep.subr.bf16.mxu0 0
          %996 = vmatpush2.bf16.msra.mxu0 0
          %997 = vmatprep.subr.bf16.mxu0 0
          %998 = vmatpush2.bf16.msra.mxu0 0
          %999 = vmatprep.subr.bf16.mxu0 0
          %1000 = vmatpush2.bf16.msra.mxu0 0
          %1001 = vmatprep.subr.bf16.mxu0 0
          %1002 = vmatpush2.bf16.msra.mxu0 0
          %1003 = vmatprep.subr.bf16.mxu0 0
          %1004 = vmatpush2.bf16.msra.mxu0 0
          %1005 = vmatprep.subr.bf16.mxu0 0
          %1006 = vmatpush2.bf16.msra.mxu0 0
          %1007 = vmatprep.subr.bf16.mxu0 0
          %1008 = vmatpush2.bf16.msra.mxu0 0
          %1009 = vmatprep.mubr.bf16.mxu0 0
          %1010 = vmatmul.mubr.bf16.gmra.mxu0 %v921
          %v1011 = vpop.f32.mrf.mxu0
          %v1012 = vadd.f32 0.0, %v1011
          %v1013 = vpop.f32.mrf.mxu0
          %v1014 = vpop.f32.mrf.mxu0
          %v1015 = vadd.f32 0.0, %v1014
          %v1016 = vpop.f32.mrf.mxu0
          %1017 = vmatprep.mubr.bf16.mxu0 0
          %1018 = vmatmul.mubr.bf16.gmra.mxu0 %v922
          %v1019 = vpop.f32.mrf.mxu0
          %v1020 = vadd.f32 0.0, %v1019
          %v1021 = vpop.f32.mrf.mxu0
          %v1022 = vpop.f32.mrf.mxu0
          %v1023 = vadd.f32 0.0, %v1022
          %v1024 = vpop.f32.mrf.mxu0
          %1025 = vmatprep.mubr.bf16.mxu0 0
          %1026 = vmatmul.mubr.bf16.gmra.mxu0 %v923
          %v1027 = vpop.f32.mrf.mxu0
          %v1028 = vadd.f32 0.0, %v1027
          %v1029 = vpop.f32.mrf.mxu0
          %v1030 = vpop.f32.mrf.mxu0
          %v1031 = vadd.f32 0.0, %v1030
          %v1032 = vpop.f32.mrf.mxu0
          %1033 = vmatprep.mubr.bf16.mxu0 0
          %1034 = vmatmul.mubr.bf16.gmra.mxu0 %v924
          %v1035 = vpop.f32.mrf.mxu0
          %v1036 = vadd.f32 0.0, %v1035
          %v1037 = vpop.f32.mrf.mxu0
          %v1038 = vpop.f32.mrf.mxu0
          %v1039 = vadd.f32 0.0, %v1038
          %v1040 = vpop.f32.mrf.mxu0
          %1041 = vmatprep.mubr.bf16.mxu0 0
          %1042 = vmatmul.mubr.bf16.gmra.mxu0 %v925
          %v1043 = vpop.f32.mrf.mxu0
          %v1044 = vadd.f32 0.0, %v1043
          %v1045 = vpop.f32.mrf.mxu0
          %v1046 = vpop.f32.mrf.mxu0
          %v1047 = vadd.f32 0.0, %v1046
          %v1048 = vpop.f32.mrf.mxu0
          %1049 = vmatprep.mubr.bf16.mxu0 0
          %1050 = vmatmul.mubr.bf16.gmra.mxu0 %v926
          %v1051 = vpop.f32.mrf.mxu0
          %v1052 = vadd.f32 0.0, %v1051
          %v1053 = vpop.f32.mrf.mxu0
          %v1054 = vpop.f32.mrf.mxu0
          %v1055 = vadd.f32 0.0, %v1054
          %v1056 = vpop.f32.mrf.mxu0
          %1057 = vmatprep.mubr.bf16.mxu0 0
          %1058 = vmatmul.mubr.bf16.gmra.mxu0 %v927
          %v1059 = vpop.f32.mrf.mxu0
          %v1060 = vadd.f32 0.0, %v1059
          %v1061 = vpop.f32.mrf.mxu0
          %v1062 = vpop.f32.mrf.mxu0
          %v1063 = vadd.f32 0.0, %v1062
          %v1064 = vpop.f32.mrf.mxu0
          %1065 = vmatprep.mubr.bf16.mxu0 0
          %1066 = vmatmul.mubr.bf16.gmra.mxu0 %v928
          %v1067 = vpop.f32.mrf.mxu0
          %v1068 = vadd.f32 0.0, %v1067
          %v1069 = vpop.f32.mrf.mxu0
          %v1070 = vpop.f32.mrf.mxu0
          %v1071 = vadd.f32 0.0, %v1070
          %v1072 = vpop.f32.mrf.mxu0
          %1073 = vdwg.mxu0
          %1074 = vst [vmem:[%s846] sm:$0xff] %v1012
          %1075 = vst [vmem:[%s846 + $0x8] sm:$0xff] %v1015
          %1076 = vst [vmem:[%s846 + $0x10] sm:$0xff] %v1020
          %1077 = vst [vmem:[%s846 + $0x18] sm:$0xff] %v1023
          %1078 = vst [vmem:[%s846 + $0x20] sm:$0xff] %v1028
          %1079 = vst [vmem:[%s846 + $0x28] sm:$0xff] %v1031
          %1080 = vst [vmem:[%s846 + $0x30] sm:$0xff] %v1036
          %1081 = vst [vmem:[%s846 + $0x38] sm:$0xff] %v1039
          %1082 = vst [vmem:[%s846 + $0x40] sm:$0xff] %v1044
          %1083 = vst [vmem:[%s846 + $0x48] sm:$0xff] %v1047
          %1084 = vst [vmem:[%s846 + $0x50] sm:$0xff] %v1052
          %1085 = vst [vmem:[%s846 + $0x58] sm:$0xff] %v1055
          %1086 = vst [vmem:[%s846 + $0x60] sm:$0xff] %v1060
          %1087 = vst [vmem:[%s846 + $0x68] sm:$0xff] %v1063
          %1088 = vst [vmem:[%s846 + $0x70] sm:$0xff] %v1068
          %1089 = vst [vmem:[%s846 + $0x78] sm:$0xff] %v1071
          %v1090 = vadd.f32 %v1012, %v1015
          %v1091 = vadd.f32 %v1090, %v1020
          %v1092 = vadd.f32 %v1091, %v1023
          %v1093 = vadd.f32 %v1092, %v1028
          %v1094 = vadd.f32 %v1093, %v1031
          %v1095 = vadd.f32 %v1094, %v1036
          %v1096 = vadd.f32 %v1095, %v1039
          %v1097 = vadd.f32 %v1096, %v1044
          %v1098 = vadd.f32 %v1097, %v1047
          %v1099 = vadd.f32 %v1098, %v1052
          %v1100 = vadd.f32 %v1099, %v1055
          %v1101 = vadd.f32 %v1100, %v1060
          %v1102 = vadd.f32 %v1101, %v1063
          %v1103 = vadd.f32 %v1102, %v1068
          %v1104 = vadd.f32 %v1103, %v1071
          %v1105 = vrot.slane %v1104, 4
          %v1106 = vadd.f32 %v1104, %v1105
          %v1107 = vrot.slane %v1106, 2
          %v1108 = vadd.f32 %v1106, %v1107
          %v1109 = vrot.slane %v1108, 1
          %v1110 = vadd.f32 %v1108, %v1109
          %v1111 = vmul.f32 %v1012, %v1012
          %v1112 = vmul.f32 %v1015, %v1015
          %v1113 = vmul.f32 %v1020, %v1020
          %v1114 = vmul.f32 %v1023, %v1023
          %v1115 = vmul.f32 %v1028, %v1028
          %v1116 = vmul.f32 %v1031, %v1031
          %v1117 = vmul.f32 %v1036, %v1036
          %v1118 = vmul.f32 %v1039, %v1039
          %v1119 = vmul.f32 %v1044, %v1044
          %v1120 = vmul.f32 %v1047, %v1047
          %v1121 = vmul.f32 %v1052, %v1052
          %v1122 = vmul.f32 %v1055, %v1055
          %v1123 = vmul.f32 %v1060, %v1060
          %v1124 = vmul.f32 %v1063, %v1063
          %v1125 = vmul.f32 %v1068, %v1068
          %v1126 = vmul.f32 %v1071, %v1071
          %v1127 = vadd.f32 %v1111, %v1112
          %v1128 = vadd.f32 %v1127, %v1113
          %v1129 = vadd.f32 %v1128, %v1114
          %v1130 = vadd.f32 %v1129, %v1115
          %v1131 = vadd.f32 %v1130, %v1116
          %v1132 = vadd.f32 %v1131, %v1117
          %v1133 = vadd.f32 %v1132, %v1118
          %v1134 = vadd.f32 %v1133, %v1119
          %v1135 = vadd.f32 %v1134, %v1120
          %v1136 = vadd.f32 %v1135, %v1121
          %v1137 = vadd.f32 %v1136, %v1122
          %v1138 = vadd.f32 %v1137, %v1123
          %v1139 = vadd.f32 %v1138, %v1124
          %v1140 = vadd.f32 %v1139, %v1125
          %v1141 = vadd.f32 %v1140, %v1126
          %v1142 = vrot.slane %v1141, 4
          %v1143 = vadd.f32 %v1141, %v1142
          %v1144 = vrot.slane %v1143, 2
          %v1145 = vadd.f32 %v1143, %v1144
          %v1146 = vrot.slane %v1145, 1
          %v1147 = vadd.f32 %v1145, %v1146
          %v1148 = vld [vmem:[#allocation3 + $0x2] sm:$0x3]
          %vm1149 = vcmask 1040384
          %v1150 = vsel %vm1149, %v1110, %v1147
          %v1151 = vadd.f32 %v1148, %v1150
          %1152 = vst [vmem:[#allocation3 + $0x2] sm:$0x3] %v1151
        $region76: #{tpu_custom_call.1} parent=51 // pred_fallthru
          _
        %p1153 = scmp.eq.s32.totalorder %s30, 2
        // Predicated region
        $region81: #{tpu_custom_call.1} parent=51 // pred_check
          %p1154 = pneg %p1153
        $region82: #{tpu_custom_call.1} parent=51 // pred_check_branch
          %1156 = sbr.rel (%p1154) target = $region84
        $region83: #{tpu_custom_call.1} parent=51 // pred_region
          // Predicated region
          $region85: #{tpu_custom_call.1} parent=83 // pred_check
            %p1157 = pneg %p384
          $region86: #{tpu_custom_call.1} parent=83 // pred_check_branch
            %1159 = sbr.rel (%p1157) target = $region88
          $region87: #{tpu_custom_call.1} parent=83 // pred_region
            %v1160 = vld [vmem:[#allocation3 + $0x2] sm:$0x1]
            %v1161 = vmul.f32 %v1160, 0.00390625
            %v1162 = vld [vmem:[#allocation3 + $0x3] sm:$0x1]
            %v1163 = vmul.f32 %v1162, 0.00390625
            %v1164 = vmul.f32 %v1161, %v1161
            %v1165 = vsub.f32 %v1163, %v1164
            %v1166 = vld [vmem:[%s6] sm:$0x1]
            %v1167 = vadd.f32 %v1165, 1e-05
            %v1168 = vrsqrt.pop %v1167
            %v1169 = vmul.f32 %v1166, %v1168
            %v1170 = vld [vmem:[%s7] sm:$0x1]
            %v1171 = vmul.f32 %v1161, %v1169
            %v1172 = vsub.f32 %v1170, %v1171
            %v1174 = vlaneseq
            %v1175 = vshrl.u32 %v1174, 7
            %v1176 = vsub.s32 0, %v1175
            %v1177 = vrot.slane %v1172, %v1176
            %vm1179 = vcmask 1040384
            %v1180 = vsel %vm1179, %v1169, %v1177
            %1181 = vst [vmem:[#allocation3 + $0x6] sm:$0x3] %v1180
          $region88: #{tpu_custom_call.1} parent=83 // pred_fallthru
            _
          %s1182 = scalar_lea.vmem [#allocation2], %s382
          %v1183 = vld [vmem:[%s1182] sm:$0xff]
          %v1184 = vld [vmem:[%s1182 + $0x8] sm:$0xff]
          %v1185 = vld [vmem:[%s1182 + $0x10] sm:$0xff]
          %v1186 = vld [vmem:[%s1182 + $0x18] sm:$0xff]
          %v1187 = vld [vmem:[%s1182 + $0x20] sm:$0xff]
          %v1188 = vld [vmem:[%s1182 + $0x28] sm:$0xff]
          %v1189 = vld [vmem:[%s1182 + $0x30] sm:$0xff]
          %v1190 = vld [vmem:[%s1182 + $0x38] sm:$0xff]
          %v1191 = vld [vmem:[%s1182 + $0x40] sm:$0xff]
          %v1192 = vld [vmem:[%s1182 + $0x48] sm:$0xff]
          %v1193 = vld [vmem:[%s1182 + $0x50] sm:$0xff]
          %v1194 = vld [vmem:[%s1182 + $0x58] sm:$0xff]
          %v1195 = vld [vmem:[%s1182 + $0x60] sm:$0xff]
          %v1196 = vld [vmem:[%s1182 + $0x68] sm:$0xff]
          %v1197 = vld [vmem:[%s1182 + $0x70] sm:$0xff]
          %v1198 = vld [vmem:[%s1182 + $0x78] sm:$0xff]
          %v1199 = vld [vmem:[#allocation3 + $0x6] sm:$0x1]
          %v1200 = vlaneseq
          %v1201 = vshrl.u32 %v1200, 7
          %v1202 = vsub.s32 0, %v1201
          %v1203 = vrot.slane %v1199, %v1202
          %v1204 = vmul.f32 %v1183, %v1203
          %v1205 = vmul.f32 %v1184, %v1203
          %v1206 = vmul.f32 %v1185, %v1203
          %v1207 = vmul.f32 %v1186, %v1203
          %v1208 = vmul.f32 %v1187, %v1203
          %v1209 = vmul.f32 %v1188, %v1203
          %v1210 = vmul.f32 %v1189, %v1203
          %v1211 = vmul.f32 %v1190, %v1203
          %v1212 = vmul.f32 %v1191, %v1203
          %v1213 = vmul.f32 %v1192, %v1203
          %v1214 = vmul.f32 %v1193, %v1203
          %v1215 = vmul.f32 %v1194, %v1203
          %v1216 = vmul.f32 %v1195, %v1203
          %v1217 = vmul.f32 %v1196, %v1203
          %v1218 = vmul.f32 %v1197, %v1203
          %v1219 = vmul.f32 %v1198, %v1203
          %v1220 = vld [vmem:[#allocation3 + $0x7] sm:$0x1]
          %v1221 = vlaneseq
          %v1222 = vshrl.u32 %v1221, 7
          %v1223 = vsub.s32 0, %v1222
          %v1224 = vrot.slane %v1220, %v1223
          %v1225 = vadd.f32 %v1204, %v1224
          %v1226 = vadd.f32 %v1205, %v1224
          %v1227 = vadd.f32 %v1206, %v1224
          %v1228 = vadd.f32 %v1207, %v1224
          %v1229 = vadd.f32 %v1208, %v1224
          %v1230 = vadd.f32 %v1209, %v1224
          %v1231 = vadd.f32 %v1210, %v1224
          %v1232 = vadd.f32 %v1211, %v1224
          %v1233 = vadd.f32 %v1212, %v1224
          %v1234 = vadd.f32 %v1213, %v1224
          %v1235 = vadd.f32 %v1214, %v1224
          %v1236 = vadd.f32 %v1215, %v1224
          %v1237 = vadd.f32 %v1216, %v1224
          %v1238 = vadd.f32 %v1217, %v1224
          %v1239 = vadd.f32 %v1218, %v1224
          %v1240 = vadd.f32 %v1219, %v1224
          %v1241 = vld [vmem:[%s334] sm:$0xf]
          %v1242 = vld [vmem:[%s334 + $0x4] sm:$0xf]
          %v1243 = vld [vmem:[%s334 + $0x8] sm:$0xf]
          %v1244 = vld [vmem:[%s334 + $0xc] sm:$0xf]
          %v1245 = vld [vmem:[%s334 + $0x10] sm:$0xf]
          %v1246 = vld [vmem:[%s334 + $0x14] sm:$0xf]
          %v1247 = vld [vmem:[%s334 + $0x18] sm:$0xf]
          %v1248 = vld [vmem:[%s334 + $0x1c] sm:$0xf]
          %v1249 = vld [vmem:[%s334 + $0x20] sm:$0xf]
          %v1250 = vld [vmem:[%s334 + $0x24] sm:$0xf]
          %v1251 = vld [vmem:[%s334 + $0x28] sm:$0xf]
          %v1252 = vld [vmem:[%s334 + $0x2c] sm:$0xf]
          %v1253 = vld [vmem:[%s334 + $0x30] sm:$0xf]
          %v1254 = vld [vmem:[%s334 + $0x34] sm:$0xf]
          %v1255 = vld [vmem:[%s334 + $0x38] sm:$0xf]
          %v1256 = vld [vmem:[%s334 + $0x3c] sm:$0xf]
          %v1257 = vunpack.c.l.bf16 %v1241
          %v1258 = vunpack.c.l.bf16 %v1242
          %v1259 = vunpack.c.l.bf16 %v1243
          %v1260 = vunpack.c.l.bf16 %v1244
          %v1261 = vunpack.c.l.bf16 %v1245
          %v1262 = vunpack.c.l.bf16 %v1246
          %v1263 = vunpack.c.l.bf16 %v1247
          %v1264 = vunpack.c.l.bf16 %v1248
          %v1265 = vunpack.c.l.bf16 %v1249
          %v1266 = vunpack.c.l.bf16 %v1250
          %v1267 = vunpack.c.l.bf16 %v1251
          %v1268 = vunpack.c.l.bf16 %v1252
          %v1269 = vunpack.c.l.bf16 %v1253
          %v1270 = vunpack.c.l.bf16 %v1254
          %v1271 = vunpack.c.l.bf16 %v1255
          %v1272 = vunpack.c.l.bf16 %v1256
          %v1273 = vadd.f32 %v1225, %v1257
          %v1274 = vadd.f32 %v1226, %v1258
          %v1275 = vadd.f32 %v1227, %v1259
          %v1276 = vadd.f32 %v1228, %v1260
          %v1277 = vadd.f32 %v1229, %v1261
          %v1278 = vadd.f32 %v1230, %v1262
          %v1279 = vadd.f32 %v1231, %v1263
          %v1280 = vadd.f32 %v1232, %v1264
          %v1281 = vadd.f32 %v1233, %v1265
          %v1282 = vadd.f32 %v1234, %v1266
          %v1283 = vadd.f32 %v1235, %v1267
          %v1284 = vadd.f32 %v1236, %v1268
          %v1285 = vadd.f32 %v1237, %v1269
          %v1286 = vadd.f32 %v1238, %v1270
          %v1287 = vadd.f32 %v1239, %v1271
          %v1288 = vadd.f32 %v1240, %v1272
          %vm1289 = vcmp.gt.f32.partialorder %v1273, 0.0
          %vm1290 = vcmp.gt.f32.partialorder %v1274, 0.0
          %vm1291 = vcmp.gt.f32.partialorder %v1275, 0.0
          %vm1292 = vcmp.gt.f32.partialorder %v1276, 0.0
          %vm1293 = vcmp.gt.f32.partialorder %v1277, 0.0
          %vm1294 = vcmp.gt.f32.partialorder %v1278, 0.0
          %vm1295 = vcmp.gt.f32.partialorder %v1279, 0.0
          %vm1296 = vcmp.gt.f32.partialorder %v1280, 0.0
          %vm1297 = vcmp.gt.f32.partialorder %v1281, 0.0
          %vm1298 = vcmp.gt.f32.partialorder %v1282, 0.0
          %vm1299 = vcmp.gt.f32.partialorder %v1283, 0.0
          %vm1300 = vcmp.gt.f32.partialorder %v1284, 0.0
          %vm1301 = vcmp.gt.f32.partialorder %v1285, 0.0
          %vm1302 = vcmp.gt.f32.partialorder %v1286, 0.0
          %vm1303 = vcmp.gt.f32.partialorder %v1287, 0.0
          %vm1304 = vcmp.gt.f32.partialorder %v1288, 0.0
          %v1305 = vmul.f32 %v1273, 1.442695
          %v1306 = vpow.pop %v1305
          %v1307 = vmul.f32 %v1274, 1.442695
          %v1308 = vpow.pop %v1307
          %v1309 = vmul.f32 %v1275, 1.442695
          %v1310 = vpow.pop %v1309
          %v1311 = vmul.f32 %v1276, 1.442695
          %v1312 = vpow.pop %v1311
          %v1313 = vmul.f32 %v1277, 1.442695
          %v1314 = vpow.pop %v1313
          %v1315 = vmul.f32 %v1278, 1.442695
          %v1316 = vpow.pop %v1315
          %v1317 = vmul.f32 %v1279, 1.442695
          %v1318 = vpow.pop %v1317
          %v1319 = vmul.f32 %v1280, 1.442695
          %v1320 = vpow.pop %v1319
          %v1321 = vmul.f32 %v1281, 1.442695
          %v1322 = vpow.pop %v1321
          %v1323 = vmul.f32 %v1282, 1.442695
          %v1324 = vpow.pop %v1323
          %v1325 = vmul.f32 %v1283, 1.442695
          %v1326 = vpow.pop %v1325
          %v1327 = vmul.f32 %v1284, 1.442695
          %v1328 = vpow.pop %v1327
          %v1329 = vmul.f32 %v1285, 1.442695
          %v1330 = vpow.pop %v1329
          %v1331 = vmul.f32 %v1286, 1.442695
          %v1332 = vpow.pop %v1331
          %v1333 = vmul.f32 %v1287, 1.442695
          %v1334 = vpow.pop %v1333
          %v1335 = vmul.f32 %v1288, 1.442695
          %v1336 = vpow.pop %v1335
          %v1337 = vsub.f32 %v1306, 1.0
          %v1338 = vsub.f32 %v1308, 1.0
          %v1339 = vsub.f32 %v1310, 1.0
          %v1340 = vsub.f32 %v1312, 1.0
          %v1341 = vsub.f32 %v1314, 1.0
          %v1342 = vsub.f32 %v1316, 1.0
          %v1343 = vsub.f32 %v1318, 1.0
          %v1344 = vsub.f32 %v1320, 1.0
          %v1345 = vsub.f32 %v1322, 1.0
          %v1346 = vsub.f32 %v1324, 1.0
          %v1347 = vsub.f32 %v1326, 1.0
          %v1348 = vsub.f32 %v1328, 1.0
          %v1349 = vsub.f32 %v1330, 1.0
          %v1350 = vsub.f32 %v1332, 1.0
          %v1351 = vsub.f32 %v1334, 1.0
          %v1352 = vsub.f32 %v1336, 1.0
          %v1353 = vmul.f32 %v1337, 1.6732632
          %v1354 = vmul.f32 %v1338, 1.6732632
          %v1355 = vmul.f32 %v1339, 1.6732632
          %v1356 = vmul.f32 %v1340, 1.6732632
          %v1357 = vmul.f32 %v1341, 1.6732632
          %v1358 = vmul.f32 %v1342, 1.6732632
          %v1359 = vmul.f32 %v1343, 1.6732632
          %v1360 = vmul.f32 %v1344, 1.6732632
          %v1361 = vmul.f32 %v1345, 1.6732632
          %v1362 = vmul.f32 %v1346, 1.6732632
          %v1363 = vmul.f32 %v1347, 1.6732632
          %v1364 = vmul.f32 %v1348, 1.6732632
          %v1365 = vmul.f32 %v1349, 1.6732632
          %v1366 = vmul.f32 %v1350, 1.6732632
          %v1367 = vmul.f32 %v1351, 1.6732632
          %v1368 = vmul.f32 %v1352, 1.6732632
          %v1369 = vsel %vm1289, %v1273, %v1353
          %v1370 = vsel %vm1290, %v1274, %v1354
          %v1371 = vsel %vm1291, %v1275, %v1355
          %v1372 = vsel %vm1292, %v1276, %v1356
          %v1373 = vsel %vm1293, %v1277, %v1357
          %v1374 = vsel %vm1294, %v1278, %v1358
          %v1375 = vsel %vm1295, %v1279, %v1359
          %v1376 = vsel %vm1296, %v1280, %v1360
          %v1377 = vsel %vm1297, %v1281, %v1361
          %v1378 = vsel %vm1298, %v1282, %v1362
          %v1379 = vsel %vm1299, %v1283, %v1363
          %v1380 = vsel %vm1300, %v1284, %v1364
          %v1381 = vsel %vm1301, %v1285, %v1365
          %v1382 = vsel %vm1302, %v1286, %v1366
          %v1383 = vsel %vm1303, %v1287, %v1367
          %v1384 = vsel %vm1304, %v1288, %v1368
          %v1385 = vmul.f32 %v1369, 1.050701
          %v1386 = vmul.f32 %v1370, 1.050701
          %v1387 = vmul.f32 %v1371, 1.050701
          %v1388 = vmul.f32 %v1372, 1.050701
          %v1389 = vmul.f32 %v1373, 1.050701
          %v1390 = vmul.f32 %v1374, 1.050701
          %v1391 = vmul.f32 %v1375, 1.050701
          %v1392 = vmul.f32 %v1376, 1.050701
          %v1393 = vmul.f32 %v1377, 1.050701
          %v1394 = vmul.f32 %v1378, 1.050701
          %v1395 = vmul.f32 %v1379, 1.050701
          %v1396 = vmul.f32 %v1380, 1.050701
          %v1397 = vmul.f32 %v1381, 1.050701
          %v1398 = vmul.f32 %v1382, 1.050701
          %v1399 = vmul.f32 %v1383, 1.050701
          %v1400 = vmul.f32 %v1384, 1.050701
          %1401 = vst [vmem:[%s374] sm:$0xff] %v1385
          %1402 = vst [vmem:[%s374 + $0x8] sm:$0xff] %v1386
          %1403 = vst [vmem:[%s374 + $0x10] sm:$0xff] %v1387
          %1404 = vst [vmem:[%s374 + $0x18] sm:$0xff] %v1388
          %1405 = vst [vmem:[%s374 + $0x20] sm:$0xff] %v1389
          %1406 = vst [vmem:[%s374 + $0x28] sm:$0xff] %v1390
          %1407 = vst [vmem:[%s374 + $0x30] sm:$0xff] %v1391
          %1408 = vst [vmem:[%s374 + $0x38] sm:$0xff] %v1392
          %1409 = vst [vmem:[%s374 + $0x40] sm:$0xff] %v1393
          %1410 = vst [vmem:[%s374 + $0x48] sm:$0xff] %v1394
          %1411 = vst [vmem:[%s374 + $0x50] sm:$0xff] %v1395
          %1412 = vst [vmem:[%s374 + $0x58] sm:$0xff] %v1396
          %1413 = vst [vmem:[%s374 + $0x60] sm:$0xff] %v1397
          %1414 = vst [vmem:[%s374 + $0x68] sm:$0xff] %v1398
          %1415 = vst [vmem:[%s374 + $0x70] sm:$0xff] %v1399
          %1416 = vst [vmem:[%s374 + $0x78] sm:$0xff] %v1400
        $region84: #{tpu_custom_call.1} parent=51 // pred_fallthru
          _
        %s1417 = sand.u32 %s227, 1
        %s1418 = scalar_lea.sflag [#allocation6], %s1417
        %s1419 = sand.u32 %s227, 1
        %s1420 = smul.addr %s1419, 128
        %s1421 = scalar_lea.vmem [#allocation10], %s1420
        // Predicated region
        $region89: #{tpu_custom_call.1} parent=51 // pred_check
          %p1422 = pneg %p237
        $region90: #{tpu_custom_call.1} parent=51 // pred_check_branch
          %1424 = sbr.rel (%p1422) target = $region92
        $region91: #{tpu_custom_call.1} parent=51 // pred_region
          %p1425 = scmp.eq.s32.totalorder %s30, 2
          %s1426 = scalar_select %p1425, %s31, 0
          %s1427 = smul.u32 16, %s1426
          %s1429 = ssub.s32 2048, 2048
          %1430 = vsyncadd %s1418, %s1429
          %s1431 = smul.addr %s1427, 128
          %s1432 = scalar_lea.hbm %s8, %s1431
          %s1433 = sshll.u32 %s1421, 4
          %s1434 = int_to_ptr.vmem [resolvable:$true] %s1433
          %1439 = dma.vmem_to_hbm [thread:$0]  %s1434, 2048, %s1432, %s1418, 128, 128, 8
        $region92: #{tpu_custom_call.1} parent=51 // pred_fallthru
          _
      $region52: #{tpu_custom_call.1} parent=5 // pred_fallthru
        _
      %p1440 = scmp.le.s32.totalorder 2, %s21
      // Predicated region
      $region93: #{tpu_custom_call.1} parent=5 // pred_check
        %p1441 = pneg %p1440
      $region94: #{tpu_custom_call.1} parent=5 // pred_check_branch
        %1443 = sbr.rel (%p1441) target = $region96
      $region95: #{tpu_custom_call.1} parent=5 // pred_region
        %s1444 = ssub.s32 %s21, 2
        // Predicated region
        $region97: #{tpu_custom_call.1} parent=95 // pred_check
          %p1445 = pneg %p243
        $region98: #{tpu_custom_call.1} parent=95 // pred_check_branch
          %1447 = sbr.rel (%p1445) target = $region100
        $region99: #{tpu_custom_call.1} parent=95 // pred_region
          %s1448 = sand.u32 %s228, 1
          %s1449 = scalar_lea.sflag [#allocation6], %s1448
          %s1450 = sand.u32 %s228, 1
          %s1451 = smul.addr %s1450, 128
          %s1452 = scalar_lea.vmem [#allocation10], %s1451
          %1453 = dma.done %s1449, 2048
        $region100: #{tpu_custom_call.1} parent=95 // pred_fallthru
          _
      $region96: #{tpu_custom_call.1} parent=5 // pred_fallthru
        _
    $region6: #{tpu_custom_call.1} parent=1 // loop_footer
      %s25 = sadd.s32 1, %s21
    $region7: #{tpu_custom_call.1} parent=1 // loop_footer_branch
      %20 = sbr.rel target = $region3
    $region8: #{tpu_custom_call.1} parent=1 // loop_exit
      _
    %1454 = vsyncpa [#allocation5], 1
    %s1455 = scalar_lea.sflag [#allocation5], 1
    %1456 = vsyncpa %s1455, 1
    %1457 = vsyncpa [#allocation8], 1
    %1458 = vsyncpa [#allocation6], 1
    %s1459 = scalar_lea.sflag [#allocation6], 1
    %1460 = vsyncpa %s1459, 1

</llo_original>
